<compile_context>
chip_gen: v6e
topology: v6e:2x2x1
jax: 0.10.0
libtpu: 0.0.40
codegen_flags: <defaults>
</compile_context>

<pallas_src>
import math
import functools

import jax
import jax.numpy as jnp
from jax.experimental import pallas as pl
from jax.experimental.pallas import tpu as pltpu


def _icl_block_kernel(cov_ref, tgt_ref, fu_ref, emb_ref, wqk_ref, wv_ref,
                      wo_ref, cos_ref, sinm_ref, sinp_ref, out_ref,
                      *, n_heads, d_embed, seq_len, batch_per_step):
    """One batch chunk per grid step.

    Sequence tensors arrive row-flattened as (Bc*S, E). wqk_ref is the fused,
    column-permuted Q|K projection (E, 2*H*E); its output layout is
    [Q head0 | Q head1 | ... | K head0 | ...], each E-wide head block in
    half-split order so RoPE's rotate-half is a lane roll by E//2 inside every
    head block (sin tables are zeroed where the roll crosses a block boundary).
    """
    H, E, S, Bc = n_heads, d_embed, seq_len, batch_per_step
    HE = H * E
    W = 2 * HE
    rows = Bc * S
    half = E // 2
    scale = 1.0 / math.sqrt(E)

    cov = cov_ref[...]          # (rows, E)
    tgt = tgt_ref[...]          # (rows, E)
    fu = fu_ref[...]            # (rows, E)
    emb = emb_ref[...]          # (V, E)

    # ---- calculate_embedding_expectation(functional_update) (eval, no grad) ----
    # fu @ emb.T without an explicit transpose: contract on the last dims.
    logits = jax.lax.dot_general(fu, emb, (((1,), (1,)), ((), ())),
                                 preferred_element_type=jnp.float32)   # (rows, V)
    logits = logits - jnp.max(logits, axis=-1, keepdims=True)
    pe = jnp.exp(logits)
    denom = jnp.sum(pe, axis=-1, keepdims=True)
    # softmax(fu @ emb.T) @ emb == (exp(..) @ emb) / denom: normalize after the
    # (rows,V)@(V,E) matmul so the scale touches E lanes, not V.
    # approx=False here: the expectation feeds a subtraction (tgt - expectation).
    expectation = (jnp.dot(pe, emb, preferred_element_type=jnp.float32)
                   * pl.reciprocal(denom, approx=False))               # (rows, E)
    v_in = tgt - expectation

    # ---- fused projections ----
    qk = jnp.dot(cov, wqk_ref[...], preferred_element_type=jnp.float32)     # (rows, 2*H*E)
    v_all = jnp.dot(v_in, wv_ref[...], preferred_element_type=jnp.float32)  # (rows, H*E)

    # ---- RoPE: rotate-half inside every E-wide head block via lane rolls ----
    cos_t = cos_ref[...]        # (S, 2*H*E)
    sinm_t = sinm_ref[...]
    sinp_t = sinp_ref[...]
    if Bc > 1:                  # broadcast over the chunk's (b-major) rows in VMEM
        cos_t = jnp.tile(cos_t, (Bc, 1))
        sinm_t = jnp.tile(sinm_t, (Bc, 1))
        sinp_t = jnp.tile(sinp_t, (Bc, 1))
    up = pltpu.roll(qk, shift=W - half, axis=1)    # up[:, p]   = qk[:, p + half]
    down = pltpu.roll(qk, shift=half, axis=1)      # down[:, p] = qk[:, p - half]
    # sinm/sinp are zero on lanes where up/down wrapped across a head block, so the
    # rolls never leak between heads or between the Q and K halves.
    qk = qk * cos_t + up * sinm_t + down * sinp_t

    # ---- attention (eval mode: drop_attn / drop_resid are identity) ----
    qk3 = qk.reshape(Bc, S, W)
    v3 = v_all.reshape(Bc, S, HE)

    r = jax.lax.broadcasted_iota(jnp.int32, (S, S), 0)
    c = jax.lax.broadcasted_iota(jnp.int32, (S, S), 1)
    # triu(diagonal=0) masked, except (0, 0): no row is fully masked.
    masked = jnp.logical_and(c >= r,
                             jnp.logical_not(jnp.logical_and(r == 0, c == 0)))
    neg = jnp.float32(-1e30)    # large finite negative: NaN-robust vs -inf

    head_outs = []
    for h in range(H):
        q_h = qk3[:, :, h * E:(h + 1) * E]              # (Bc, S, E)
        k_h = qk3[:, :, HE + h * E:HE + (h + 1) * E]    # (Bc, S, E)
        v_h = v3[:, :, h * E:(h + 1) * E]               # (Bc, S, E)
        s = jnp.einsum('bqe,bke->bqk', q_h, k_h,
                       preferred_element_type=jnp.float32) * scale
        s = jnp.where(masked[None], neg, s)
        s = s - jnp.max(s, axis=-1, keepdims=True)
        p = jnp.exp(s)
        l = jnp.sum(p, axis=-1, keepdims=True)
        o = jnp.einsum('bqk,bke->bqe', p, v_h,
                       preferred_element_type=jnp.float32)
        head_outs.append(o * pl.reciprocal(l, approx=True))

    # ---- fused output projection + residual: one matmul, one full-block store ----
    attn = jnp.concatenate(head_outs, axis=-1).reshape(rows, HE)   # (rows, H*E)
    delta = jnp.dot(attn, wo_ref[...], preferred_element_type=jnp.float32)
    out_ref[...] = fu + delta


def icl_block_forward(covariates, targets, functional_update, emb_w,
                      wq_t, wk_t, wv_t, wo_t, *, n_heads, d_embed,
                      num_chunks=1):
    """Returns (covariates, targets, functional_update + delta_f).

    Weights are the pre-transposed PyTorch Linear weights:
      wq_t/wk_t/wv_t: (E, H*E), wo_t: (H*E, E), emb_w: (V, E).

    num_chunks splits the batch into grid steps (default 1 = single step, no
    pipelining; right for tiny B*S).  For large B*S pick chunks a few MB each so
    BlockSpec double-buffering overlaps HBM with compute; on multi-TensorCore
    parts use an even split so the "parallel" grid axis can shard across cores.
    """
    # TODO(synk): at production sizes also tile the (rows, V) vocab softmax over V
    # (online max/sum) and set CompilerParams(vmem_limit_bytes=...) for v7x's
    # 64 MiB/TC VMEM budget.
    B, S, E = covariates.shape
    assert E == d_embed and E % 2 == 0
    H = n_heads
    HE = H * E
    V = emb_w.shape[0]
    assert B % num_chunks == 0
    Bc = B // num_chunks
    rows, rows_c = B * S, Bc * S

    # ---- one-time parameter prep (hoist to parameter-setup time in production) ----
    # Per-head half-split column permutation for Q/K so rotate-half RoPE is a roll.
    head_perm = jnp.concatenate([jnp.arange(0, E, 2), jnp.arange(1, E, 2)])
    col_perm = jnp.concatenate([h * E + head_perm for h in range(H)])
    wqk = jnp.concatenate([wq_t[:, col_perm], wk_t[:, col_perm]], axis=1)  # (E, 2*H*E)

    # RoPE tables in the same half-split layout, shared across batch and heads.
    # TODO(synk): upstream RotaryPositionalEmbeddings source not provided; standard
    # base-10000 interleaved-pair RoPE over the sequence axis is assumed.
    half = E // 2
    inv_freq = 1.0 / (10000.0 ** (jnp.arange(half, dtype=jnp.float32) * 2.0 / E))
    ang = jnp.arange(S, dtype=jnp.float32)[:, None] * inv_freq[None, :]    # (S, E/2)
    zeros = jnp.zeros_like(ang)
    cos_tab = jnp.tile(jnp.concatenate([jnp.cos(ang), jnp.cos(ang)], -1), (1, 2 * H))
    sinm_tab = jnp.tile(jnp.concatenate([-jnp.sin(ang), zeros], -1), (1, 2 * H))
    sinp_tab = jnp.tile(jnp.concatenate([zeros, jnp.sin(ang)], -1), (1, 2 * H))

    # Row-flatten the sequence tensors so row-wise work fuses across the batch.
    cov_flat = covariates.reshape(rows, E)
    tgt_flat = targets.reshape(rows, E)
    fu_flat = functional_update.reshape(rows, E)

    kernel = functools.partial(_icl_block_kernel, n_heads=H, d_embed=E,
                               seq_len=S, batch_per_step=Bc)

    per_chunk = lambda g: (g, 0)
    whole = lambda g: (0, 0)

    # NOTE: under jit with a donated functional_update, add input_output_aliases={2: 0}
    # so the residual writes in place; omitted for eager (non-donated) inputs.
    fu_new_flat = pl.pallas_call(
        kernel,
        out_shape=jax.ShapeDtypeStruct((rows, E), jnp.float32),
        grid_spec=pltpu.PrefetchScalarGridSpec(
            num_scalar_prefetch=0,
            grid=(num_chunks,),
            in_specs=[
                pl.BlockSpec((rows_c, E), per_chunk),      # covariates
                pl.BlockSpec((rows_c, E), per_chunk),      # targets
                pl.BlockSpec((rows_c, E), per_chunk),      # functional_update
                pl.BlockSpec((V, E), whole),               # embedding matrix
                pl.BlockSpec((E, 2 * HE), whole),          # fused, permuted Wq|Wk
                pl.BlockSpec((E, HE), whole),              # Wv (native layout)
                pl.BlockSpec((HE, E), whole),              # Wo (native layout)
                pl.BlockSpec((S, 2 * HE), whole),          # RoPE cos table
                pl.BlockSpec((S, 2 * HE), whole),          # RoPE -sin (first halves)
                pl.BlockSpec((S, 2 * HE), whole),          # RoPE +sin (second halves)
            ],
            out_specs=pl.BlockSpec((rows_c, E), per_chunk),
        ),
        compiler_params=pltpu.CompilerParams(dimension_semantics=("parallel",)),
    )(cov_flat, tgt_flat, fu_flat, emb_w, wqk, wv_t, wo_t,
      cos_tab, sinm_tab, sinp_tab)

    return covariates, targets, fu_new_flat.reshape(B, S, E)


def _reference(cov, tgt, fu, emb, wq_t, wk_t, wv_t, wo_t, cos, sin, rot,
               n_heads, d_embed):
    """Plain-JAX reference mirroring the PyTorch forward (eval mode)."""
    B, S, E = cov.shape
    H = n_heads
    p = jax.nn.softmax(fu @ emb.T, axis=-1)
    v_in = tgt - p @ emb
    q = (cov @ wq_t).reshape(B, S, H, E).transpose(0, 2, 1, 3)   # (B,H,S,E)
    k = (cov @ wk_t).reshape(B, S, H, E).transpose(0, 2, 1, 3)
    v = (v_in @ wv_t).reshape(B, S, H, E).transpose(0, 2, 1, 3)
    q = q * cos + (q @ rot) * sin          # cos/sin (S,E) broadcast over (B,H)
    k = k * cos + (k @ rot) * sin
    scores = jnp.einsum('bhse,bhte->bhst', q, k) / math.sqrt(E)
    row = jnp.arange(S)[:, None]
    col = jnp.arange(S)[None, :]
    masked = (col >= row) & ~((row == 0) & (col == 0))
    scores = jnp.where(masked, -jnp.inf, scores)
    probs = jax.nn.softmax(scores, axis=-1)
    out = jnp.einsum('bhst,bhte->bhse', probs, v)
    out = out.transpose(0, 2, 1, 3).reshape(B, S, H * E)
    return fu + out @ wo_t


if __name__ == "__main__":
    # Small config consistent with the module: d_embed=32, n_heads=2, vocab=64.
    B, S, E, H, V = 2, 8, 32, 2, 64
    HE = H * E

    key = jax.random.PRNGKey(0)
    ks = jax.random.split(key, 8)
    covariates = jax.random.normal(ks[0], (B, S, E), dtype=jnp.float32)
    targets = jax.random.normal(ks[1], (B, S, E), dtype=jnp.float32)
    functional_update = jax.random.normal(ks[2], (B, S, E), dtype=jnp.float32)

    # PyTorch Linear weight is (out, in); we store the pre-transposed (in, out).
    lim = 1.0 / math.sqrt(E)
    wq_t = jax.random.uniform(ks[3], (E, HE), minval=-lim, maxval=lim, dtype=jnp.float32)
    wk_t = jax.random.uniform(ks[4], (E, HE), minval=-lim, maxval=lim, dtype=jnp.float32)
    wv_t = jax.random.uniform(ks[5], (E, HE), minval=-lim, maxval=lim, dtype=jnp.float32)
    lim_o = 1.0 / math.sqrt(HE)
    wo_t = jax.random.uniform(ks[6], (HE, E), minval=-lim_o, maxval=lim_o, dtype=jnp.float32)
    emb_w = jax.random.normal(ks[7], (V, E), dtype=jnp.float32)

    # Pure-JAX reference of the same forward (independent interleaved-pair RoPE form).
    half = E // 2
    inv_freq = 1.0 / (10000.0 ** (jnp.arange(half, dtype=jnp.float32) * 2.0 / E))
    ang = jnp.arange(S, dtype=jnp.float32)[:, None] * inv_freq[None, :]
    cos = jnp.repeat(jnp.cos(ang), 2, axis=-1)
    sin = jnp.repeat(jnp.sin(ang), 2, axis=-1)
    idx = jnp.arange(0, E, 2)
    rot = (jnp.zeros((E, E), dtype=jnp.float32)
           .at[idx + 1, idx].set(-1.0)
           .at[idx, idx + 1].set(1.0))
    fu_ref = _reference(covariates, targets, functional_update, emb_w,
                        wq_t, wk_t, wv_t, wo_t, cos, sin, rot, H, E)

    cov_out, tgt_out, fu_out = icl_block_forward(
        covariates, targets, functional_update,
        emb_w, wq_t, wk_t, wv_t, wo_t, n_heads=H, d_embed=E)
    jax.block_until_ready(fu_out)

    # Tolerance accounts for pl.reciprocal(approx=True) in the attention softmax.
    assert jnp.allclose(fu_out, fu_ref, atol=2e-3, rtol=2e-3), "mismatch vs reference"
    assert jnp.array_equal(cov_out, covariates) and jnp.array_equal(tgt_out, targets)

    print("KERNEL_OK")
</pallas_src>

<mosaic_0001>
module attributes {stable_mosaic.version = 11 : i64} {
  func.func @_icl_block_kernel(%arg0: i32, %arg1: memref<16x32xf32, #tpu.memory_space<vmem>>, %arg2: memref<16x32xf32, #tpu.memory_space<vmem>>, %arg3: memref<16x32xf32, #tpu.memory_space<vmem>>, %arg4: memref<64x32xf32, #tpu.memory_space<vmem>>, %arg5: memref<32x128xf32, #tpu.memory_space<vmem>>, %arg6: memref<32x64xf32, #tpu.memory_space<vmem>>, %arg7: memref<64x32xf32, #tpu.memory_space<vmem>>, %arg8: memref<8x128xf32, #tpu.memory_space<vmem>>, %arg9: memref<8x128xf32, #tpu.memory_space<vmem>>, %arg10: memref<8x128xf32, #tpu.memory_space<vmem>>, %arg11: memref<16x32xf32, #tpu.memory_space<vmem>>) attributes {dimension_semantics = [#tpu.dimension_semantics<parallel>], iteration_bounds = array<i64: 1>, scalar_prefetch = 0 : i64, scratch_operands = 0 : i64, tpu.core_type = #tpu.core_type<tc>, window_params = [{transform_indices = @transform_0, window_bounds = array<i64: 16, 32>}, {transform_indices = @transform_1, window_bounds = array<i64: 16, 32>}, {transform_indices = @transform_2, window_bounds = array<i64: 16, 32>}, {pipeline_mode = #tpu.pipeline_mode<synchronous>, transform_indices = @transform_3, window_bounds = array<i64: 64, 32>}, {pipeline_mode = #tpu.pipeline_mode<synchronous>, transform_indices = @transform_4, window_bounds = array<i64: 32, 128>}, {pipeline_mode = #tpu.pipeline_mode<synchronous>, transform_indices = @transform_5, window_bounds = array<i64: 32, 64>}, {pipeline_mode = #tpu.pipeline_mode<synchronous>, transform_indices = @transform_6, window_bounds = array<i64: 64, 32>}, {pipeline_mode = #tpu.pipeline_mode<synchronous>, transform_indices = @transform_7, window_bounds = array<i64: 8, 128>}, {pipeline_mode = #tpu.pipeline_mode<synchronous>, transform_indices = @transform_8, window_bounds = array<i64: 8, 128>}, {pipeline_mode = #tpu.pipeline_mode<synchronous>, transform_indices = @transform_9, window_bounds = array<i64: 8, 128>}, {transform_indices = @transform_10, window_bounds = array<i64: 16, 32>}]} {
    %c0 = arith.constant 0 : index
    %c0_0 = arith.constant 0 : index
    %0 = vector.load %arg1[%c0, %c0_0] : memref<16x32xf32, #tpu.memory_space<vmem>>, vector<16x32xf32>
    %c0_1 = arith.constant 0 : index
    %c0_2 = arith.constant 0 : index
    %1 = vector.load %arg2[%c0_1, %c0_2] : memref<16x32xf32, #tpu.memory_space<vmem>>, vector<16x32xf32>
    %c0_3 = arith.constant 0 : index
    %c0_4 = arith.constant 0 : index
    %2 = vector.load %arg3[%c0_3, %c0_4] : memref<16x32xf32, #tpu.memory_space<vmem>>, vector<16x32xf32>
    %c0_5 = arith.constant 0 : index
    %c0_6 = arith.constant 0 : index
    %3 = vector.load %arg4[%c0_5, %c0_6] : memref<64x32xf32, #tpu.memory_space<vmem>>, vector<64x32xf32>
    %cst = arith.constant dense<0.000000e+00> : vector<16x64xf32>
    %4 = tpu.matmul %2, %3, %cst {dimension_numbers = #tpu.dot_dimension_numbers<[1], [1], [0], [0], [0, 0, 1, 0], [], []>} : vector<16x32xf32>, vector<64x32xf32>, vector<16x64xf32> -> vector<16x64xf32>
    %cst_7 = arith.constant dense<0xFF800000> : vector<16xf32>
    %5 = vector.multi_reduction <maximumf>, %4, %cst_7 [1] : vector<16x64xf32> to vector<16xf32>
    %6 = vector.shape_cast %5 : vector<16xf32> to vector<16x1xf32>
    %7 = vector.broadcast %6 : vector<16x1xf32> to vector<16x64xf32>
    %8 = arith.subf %4, %7 : vector<16x64xf32>
    %9 = math.exp %8 : vector<16x64xf32>
    %cst_8 = arith.constant dense<0.000000e+00> : vector<16xf32>
    %10 = vector.multi_reduction <add>, %9, %cst_8 [1] : vector<16x64xf32> to vector<16xf32>
    %11 = vector.shape_cast %10 : vector<16xf32> to vector<16x1xf32>
    %cst_9 = arith.constant dense<0.000000e+00> : vector<16x32xf32>
    %12 = tpu.matmul %9, %3, %cst_9 {dimension_numbers = #tpu.dot_dimension_numbers<[1], [0], [0], [1], [0, 0, 1, 1], [], []>} : vector<16x64xf32>, vector<64x32xf32>, vector<16x32xf32> -> vector<16x32xf32>
    %13 = tpu.reciprocal %11 : vector<16x1xf32> -> vector<16x1xf32>
    %14 = vector.broadcast %13 : vector<16x1xf32> to vector<16x32xf32>
    %15 = arith.mulf %12, %14 : vector<16x32xf32>
    %16 = arith.subf %1, %15 : vector<16x32xf32>
    %c0_10 = arith.constant 0 : index
    %c0_11 = arith.constant 0 : index
    %17 = vector.load %arg5[%c0_10, %c0_11] : memref<32x128xf32, #tpu.memory_space<vmem>>, vector<32x128xf32>
    %cst_12 = arith.constant dense<0.000000e+00> : vector<16x128xf32>
    %18 = tpu.matmul %0, %17, %cst_12 {dimension_numbers = #tpu.dot_dimension_numbers<[1], [0], [0], [1], [0, 0, 1, 1], [], []>} : vector<16x32xf32>, vector<32x128xf32>, vector<16x128xf32> -> vector<16x128xf32>
    %c0_13 = arith.constant 0 : index
    %c0_14 = arith.constant 0 : index
    %19 = vector.load %arg6[%c0_13, %c0_14] : memref<32x64xf32, #tpu.memory_space<vmem>>, vector<32x64xf32>
    %cst_15 = arith.constant dense<0.000000e+00> : vector<16x64xf32>
    %20 = tpu.matmul %16, %19, %cst_15 {dimension_numbers = #tpu.dot_dimension_numbers<[1], [0], [0], [1], [0, 0, 1, 1], [], []>} : vector<16x32xf32>, vector<32x64xf32>, vector<16x64xf32> -> vector<16x64xf32>
    %c0_16 = arith.constant 0 : index
    %c0_17 = arith.constant 0 : index
    %21 = vector.load %arg8[%c0_16, %c0_17] : memref<8x128xf32, #tpu.memory_space<vmem>>, vector<8x128xf32>
    %c0_18 = arith.constant 0 : index
    %c0_19 = arith.constant 0 : index
    %22 = vector.load %arg9[%c0_18, %c0_19] : memref<8x128xf32, #tpu.memory_space<vmem>>, vector<8x128xf32>
    %c0_20 = arith.constant 0 : index
    %c0_21 = arith.constant 0 : index
    %23 = vector.load %arg10[%c0_20, %c0_21] : memref<8x128xf32, #tpu.memory_space<vmem>>, vector<8x128xf32>
    %24 = tpu.concatenate %21, %21 in 0 : vector<8x128xf32>, vector<8x128xf32> -> vector<16x128xf32>
    %25 = tpu.concatenate %22, %22 in 0 : vector<8x128xf32>, vector<8x128xf32> -> vector<16x128xf32>
    %26 = tpu.concatenate %23, %23 in 0 : vector<8x128xf32>, vector<8x128xf32> -> vector<16x128xf32>
    %c112_i32 = arith.constant 112 : i32
    %27 = tpu.dynamic_rotate %18 by %c112_i32 dim 1 : vector<16x128xf32>, i32 -> vector<16x128xf32>
    %c16_i32 = arith.constant 16 : i32
    %28 = tpu.dynamic_rotate %18 by %c16_i32 dim 1 : vector<16x128xf32>, i32 -> vector<16x128xf32>
    %29 = arith.mulf %18, %24 : vector<16x128xf32>
    %30 = arith.mulf %27, %25 : vector<16x128xf32>
    %31 = arith.addf %29, %30 : vector<16x128xf32>
    %32 = arith.mulf %28, %26 : vector<16x128xf32>
    %33 = arith.addf %31, %32 : vector<16x128xf32>
    %34 = vector.shape_cast %33 : vector<16x128xf32> to vector<2x8x128xf32>
    %35 = vector.shape_cast %20 : vector<16x64xf32> to vector<2x8x64xf32>
    %36 = tpu.iota {dimensions = array<i32: 0>} : vector<8x8xi32>
    %37 = tpu.iota {dimensions = array<i32: 1>} : vector<8x8xi32>
    %38 = arith.cmpi sge, %37, %36 : vector<8x8xi32>
    %c0_i32 = arith.constant 0 : i32
    %39 = vector.broadcast %c0_i32 : i32 to vector<8x8xi32>
    %40 = arith.cmpi eq, %36, %39 : vector<8x8xi32>
    %c0_i32_22 = arith.constant 0 : i32
    %41 = vector.broadcast %c0_i32_22 : i32 to vector<8x8xi32>
    %42 = arith.cmpi eq, %37, %41 : vector<8x8xi32>
    %43 = arith.andi %40, %42 : vector<8x8xi1>
    %cst_23 = arith.constant dense<true> : vector<8x8xi1>
    %44 = arith.xori %43, %cst_23 : vector<8x8xi1>
    %45 = arith.andi %38, %44 : vector<8x8xi1>
    %46 = vector.extract_strided_slice %34 {offsets = [0, 0, 0], sizes = [2, 8, 32], strides = [1, 1, 1]} : vector<2x8x128xf32> to vector<2x8x32xf32>
    %47 = vector.extract_strided_slice %34 {offsets = [0, 0, 64], sizes = [2, 8, 32], strides = [1, 1, 1]} : vector<2x8x128xf32> to vector<2x8x32xf32>
    %48 = vector.extract_strided_slice %35 {offsets = [0, 0, 0], sizes = [2, 8, 32], strides = [1, 1, 1]} : vector<2x8x64xf32> to vector<2x8x32xf32>
    "tpu.trace_start"() <{level = 10 : i32, message = "bqe,bke->bqk"}> : () -> ()
    %cst_24 = arith.constant dense<0.000000e+00> : vector<2x8x8xf32>
    %49 = tpu.matmul %46, %47, %cst_24 {dimension_numbers = #tpu.dot_dimension_numbers<[2], [2], [1], [1], [0, 0, 0, 1, 1, 1], [0], [0]>} : vector<2x8x32xf32>, vector<2x8x32xf32>, vector<2x8x8xf32> -> vector<2x8x8xf32>
    "tpu.trace_stop"() : () -> ()
    %cst_25 = arith.constant 0.176776692 : f32
    %50 = vector.broadcast %cst_25 : f32 to vector<2x8x8xf32>
    %51 = arith.mulf %49, %50 : vector<2x8x8xf32>
    %52 = vector.shape_cast %45 : vector<8x8xi1> to vector<1x8x8xi1>
    %cst_26 = arith.constant -1.000000e+30 : f32
    %53 = vector.shape_cast %52 : vector<1x8x8xi1> to vector<1x8x8xi1>
    %54 = vector.broadcast %53 : vector<1x8x8xi1> to vector<2x8x8xi1>
    %55 = vector.broadcast %cst_26 : f32 to vector<2x8x8xf32>
    %56 = arith.select %54, %55, %51 : vector<2x8x8xi1>, vector<2x8x8xf32>
    %cst_27 = arith.constant dense<0xFF800000> : vector<2x8xf32>
    %57 = vector.multi_reduction <maximumf>, %56, %cst_27 [2] : vector<2x8x8xf32> to vector<2x8xf32>
    %58 = vector.shape_cast %57 : vector<2x8xf32> to vector<2x8x1xf32>
    %59 = vector.broadcast %58 : vector<2x8x1xf32> to vector<2x8x8xf32>
    %60 = arith.subf %56, %59 : vector<2x8x8xf32>
    %61 = math.exp %60 : vector<2x8x8xf32>
    %cst_28 = arith.constant dense<0.000000e+00> : vector<2x8xf32>
    %62 = vector.multi_reduction <add>, %61, %cst_28 [2] : vector<2x8x8xf32> to vector<2x8xf32>
    %63 = vector.shape_cast %62 : vector<2x8xf32> to vector<2x8x1xf32>
    "tpu.trace_start"() <{level = 10 : i32, message = "bqk,bke->bqe"}> : () -> ()
    %cst_29 = arith.constant dense<0.000000e+00> : vector<2x8x32xf32>
    %64 = tpu.matmul %61, %48, %cst_29 {dimension_numbers = #tpu.dot_dimension_numbers<[2], [1], [1], [2], [0, 0, 0, 1, 1, 2], [0], [0]>} : vector<2x8x8xf32>, vector<2x8x32xf32>, vector<2x8x32xf32> -> vector<2x8x32xf32>
    "tpu.trace_stop"() : () -> ()
    %65 = tpu.reciprocal %63 {approx = true} : vector<2x8x1xf32> -> vector<2x8x1xf32>
    %66 = vector.broadcast %65 : vector<2x8x1xf32> to vector<2x8x32xf32>
    %67 = arith.mulf %64, %66 : vector<2x8x32xf32>
    %68 = vector.extract_strided_slice %34 {offsets = [0, 0, 32], sizes = [2, 8, 32], strides = [1, 1, 1]} : vector<2x8x128xf32> to vector<2x8x32xf32>
    %69 = vector.extract_strided_slice %34 {offsets = [0, 0, 96], sizes = [2, 8, 32], strides = [1, 1, 1]} : vector<2x8x128xf32> to vector<2x8x32xf32>
    %70 = vector.extract_strided_slice %35 {offsets = [0, 0, 32], sizes = [2, 8, 32], strides = [1, 1, 1]} : vector<2x8x64xf32> to vector<2x8x32xf32>
    "tpu.trace_start"() <{level = 10 : i32, message = "bqe,bke->bqk"}> : () -> ()
    %cst_30 = arith.constant dense<0.000000e+00> : vector<2x8x8xf32>
    %71 = tpu.matmul %68, %69, %cst_30 {dimension_numbers = #tpu.dot_dimension_numbers<[2], [2], [1], [1], [0, 0, 0, 1, 1, 1], [0], [0]>} : vector<2x8x32xf32>, vector<2x8x32xf32>, vector<2x8x8xf32> -> vector<2x8x8xf32>
    "tpu.trace_stop"() : () -> ()
    %cst_31 = arith.constant 0.176776692 : f32
    %72 = vector.broadcast %cst_31 : f32 to vector<2x8x8xf32>
    %73 = arith.mulf %71, %72 : vector<2x8x8xf32>
    %74 = vector.shape_cast %45 : vector<8x8xi1> to vector<1x8x8xi1>
    %cst_32 = arith.constant -1.000000e+30 : f32
    %75 = vector.shape_cast %74 : vector<1x8x8xi1> to vector<1x8x8xi1>
    %76 = vector.broadcast %75 : vector<1x8x8xi1> to vector<2x8x8xi1>
    %77 = vector.broadcast %cst_32 : f32 to vector<2x8x8xf32>
    %78 = arith.select %76, %77, %73 : vector<2x8x8xi1>, vector<2x8x8xf32>
    %cst_33 = arith.constant dense<0xFF800000> : vector<2x8xf32>
    %79 = vector.multi_reduction <maximumf>, %78, %cst_33 [2] : vector<2x8x8xf32> to vector<2x8xf32>
    %80 = vector.shape_cast %79 : vector<2x8xf32> to vector<2x8x1xf32>
    %81 = vector.broadcast %80 : vector<2x8x1xf32> to vector<2x8x8xf32>
    %82 = arith.subf %78, %81 : vector<2x8x8xf32>
    %83 = math.exp %82 : vector<2x8x8xf32>
    %cst_34 = arith.constant dense<0.000000e+00> : vector<2x8xf32>
    %84 = vector.multi_reduction <add>, %83, %cst_34 [2] : vector<2x8x8xf32> to vector<2x8xf32>
    %85 = vector.shape_cast %84 : vector<2x8xf32> to vector<2x8x1xf32>
    "tpu.trace_start"() <{level = 10 : i32, message = "bqk,bke->bqe"}> : () -> ()
    %cst_35 = arith.constant dense<0.000000e+00> : vector<2x8x32xf32>
    %86 = tpu.matmul %83, %70, %cst_35 {dimension_numbers = #tpu.dot_dimension_numbers<[2], [1], [1], [2], [0, 0, 0, 1, 1, 2], [0], [0]>} : vector<2x8x8xf32>, vector<2x8x32xf32>, vector<2x8x32xf32> -> vector<2x8x32xf32>
    "tpu.trace_stop"() : () -> ()
    %87 = tpu.reciprocal %85 {approx = true} : vector<2x8x1xf32> -> vector<2x8x1xf32>
    %88 = vector.broadcast %87 : vector<2x8x1xf32> to vector<2x8x32xf32>
    %89 = arith.mulf %86, %88 : vector<2x8x32xf32>
    %90 = tpu.concatenate %67, %89 in 2 : vector<2x8x32xf32>, vector<2x8x32xf32> -> vector<2x8x64xf32>
    %91 = vector.shape_cast %90 : vector<2x8x64xf32> to vector<16x64xf32>
    %c0_36 = arith.constant 0 : index
    %c0_37 = arith.constant 0 : index
    %92 = vector.load %arg7[%c0_36, %c0_37] : memref<64x32xf32, #tpu.memory_space<vmem>>, vector<64x32xf32>
    %cst_38 = arith.constant dense<0.000000e+00> : vector<16x32xf32>
    %93 = tpu.matmul %91, %92, %cst_38 {dimension_numbers = #tpu.dot_dimension_numbers<[1], [0], [0], [1], [0, 0, 1, 1], [], []>} : vector<16x64xf32>, vector<64x32xf32>, vector<16x32xf32> -> vector<16x32xf32>
    %94 = arith.addf %2, %93 : vector<16x32xf32>
    %c0_39 = arith.constant 0 : index
    %c0_40 = arith.constant 0 : index
    %95 = vector.load %arg11[%c0_39, %c0_40] : memref<16x32xf32, #tpu.memory_space<vmem>>, vector<16x32xf32>
    tpu.vector_store %arg11[%c0_39, %c0_40], %94 {strides = array<i32>} : memref<16x32xf32, #tpu.memory_space<vmem>>, vector<16x32xf32>,
    return
  }
  func.func @transform_0(%arg0: i32) -> (i32, i32) {
    %c0_i32 = arith.constant 0 : i32
    %c0_i32_0 = arith.constant 0 : i32
    return %arg0, %c0_i32 : i32, i32
  }
  func.func @transform_1(%arg0: i32) -> (i32, i32) {
    %c0_i32 = arith.constant 0 : i32
    %c0_i32_0 = arith.constant 0 : i32
    return %arg0, %c0_i32 : i32, i32
  }
  func.func @transform_2(%arg0: i32) -> (i32, i32) {
    %c0_i32 = arith.constant 0 : i32
    %c0_i32_0 = arith.constant 0 : i32
    return %arg0, %c0_i32 : i32, i32
  }
  func.func @transform_3(%arg0: i32) -> (i32, i32) {
    %c0_i32 = arith.constant 0 : i32
    %c0_i32_0 = arith.constant 0 : i32
    %c0_i32_1 = arith.constant 0 : i32
    return %c0_i32, %c0_i32_0 : i32, i32
  }
  func.func @transform_4(%arg0: i32) -> (i32, i32) {
    %c0_i32 = arith.constant 0 : i32
    %c0_i32_0 = arith.constant 0 : i32
    %c0_i32_1 = arith.constant 0 : i32
    return %c0_i32, %c0_i32_0 : i32, i32
  }
  func.func @transform_5(%arg0: i32) -> (i32, i32) {
    %c0_i32 = arith.constant 0 : i32
    %c0_i32_0 = arith.constant 0 : i32
    %c0_i32_1 = arith.constant 0 : i32
    return %c0_i32, %c0_i32_0 : i32, i32
  }
  func.func @transform_6(%arg0: i32) -> (i32, i32) {
    %c0_i32 = arith.constant 0 : i32
    %c0_i32_0 = arith.constant 0 : i32
    %c0_i32_1 = arith.constant 0 : i32
    return %c0_i32, %c0_i32_0 : i32, i32
  }
  func.func @transform_7(%arg0: i32) -> (i32, i32) {
    %c0_i32 = arith.constant 0 : i32
    %c0_i32_0 = arith.constant 0 : i32
    %c0_i32_1 = arith.constant 0 : i32
    return %c0_i32, %c0_i32_0 : i32, i32
  }
  func.func @transform_8(%arg0: i32) -> (i32, i32) {
    %c0_i32 = arith.constant 0 : i32
    %c0_i32_0 = arith.constant 0 : i32
    %c0_i32_1 = arith.constant 0 : i32
    return %c0_i32, %c0_i32_0 : i32, i32
  }
  func.func @transform_9(%arg0: i32) -> (i32, i32) {
    %c0_i32 = arith.constant 0 : i32
    %c0_i32_0 = arith.constant 0 : i32
    %c0_i32_1 = arith.constant 0 : i32
    return %c0_i32, %c0_i32_0 : i32, i32
  }
  func.func @transform_10(%arg0: i32) -> (i32, i32) {
    %c0_i32 = arith.constant 0 : i32
    %c0_i32_0 = arith.constant 0 : i32
    return %arg0, %c0_i32 : i32, i32
  }
}

</mosaic_0001>

<llo_original>
// kernel: tpu_custom_call.1
$region0: #{tpu_custom_call.1}
  #allocation0 [shape = 'u32[]', space=smem, size = 0x4, offset = 0x4, fixed_abs, tag = 'smem constant byte address 0x4 - core index']
  #allocation1 [shape = 'u32[144,128]{1,0:T(1,128)}', space=vmem, size = 0x12000, scoped, tag = 'internal scratch']
  %s0 = inlined_call_operand.vmem [shape: f32[16,32], index: 0, kind: input, shape index: {}]
  %s1 = inlined_call_operand.vmem [shape: f32[16,32], index: 1, kind: input, shape index: {}]
  %s2 = inlined_call_operand.vmem [shape: f32[16,32], index: 2, kind: input, shape index: {}]
  %s3 = inlined_call_operand.vmem [shape: f32[64,32], index: 3, kind: input, shape index: {}]
  %s4 = inlined_call_operand.vmem [shape: f32[32,128], index: 4, kind: input, shape index: {}]
  %s5 = inlined_call_operand.vmem [shape: f32[32,64], index: 5, kind: input, shape index: {}]
  %s6 = inlined_call_operand.vmem [shape: f32[64,32], index: 6, kind: input, shape index: {}]
  %s7 = inlined_call_operand.vmem [shape: f32[8,128], index: 7, kind: input, shape index: {}]
  %s8 = inlined_call_operand.vmem [shape: f32[8,128], index: 8, kind: input, shape index: {}]
  %s9 = inlined_call_operand.vmem [shape: f32[8,128], index: 9, kind: input, shape index: {}]
  %s10 = inlined_call_operand.hbm [shape: f32[16,32], index: 10, kind: output, shape index: {}]
  %s11 = sld [smem:[#allocation0]]
  $region50: #{tpu_custom_call.1} parent=0
    _
  %s13 = ssub.s32 1, %s11
  %s14 = scalar_select 0, %s13, %s11
  $region1: #{tpu_custom_call.1} parent=0
    #allocation2 [shape = 'u8[8192]{0}', space=vmem, size = 0x2000, scoped, tag = 'output window, operand 0, single buffered']
    #allocation3 [shape = 's32[1]{0}', space=sflag, size = 0x4, scoped, tag = 'scoped memory for tpu_custom_call.1']
    %15 = vsyncpa [#allocation3], 0
    // Predicated region
    $region2: #{tpu_custom_call.1} parent=1 // pred_check
      _
    $region3: #{tpu_custom_call.1} parent=1 // pred_check_branch
      %17 = sbr.rel (0) target = $region5
    $region4: #{tpu_custom_call.1} parent=1 // pred_region
      _
    $region5: #{tpu_custom_call.1} parent=1 // pred_fallthru
      _
    // Predicated region
    $region6: #{tpu_custom_call.1} parent=1 // pred_check
      _
    $region7: #{tpu_custom_call.1} parent=1 // pred_check_branch
      %19 = sbr.rel (0) target = $region9
    $region8: #{tpu_custom_call.1} parent=1 // pred_region
      _
    $region9: #{tpu_custom_call.1} parent=1 // pred_fallthru
      _
    // Predicated region
    $region10: #{tpu_custom_call.1} parent=1 // pred_check
      _
    $region11: #{tpu_custom_call.1} parent=1 // pred_check_branch
      %21 = sbr.rel (0) target = $region13
    $region12: #{tpu_custom_call.1} parent=1 // pred_region
      _
    $region13: #{tpu_custom_call.1} parent=1 // pred_fallthru
      _
    // Predicated region
    $region14: #{tpu_custom_call.1} parent=1 // pred_check
      _
    $region15: #{tpu_custom_call.1} parent=1 // pred_check_branch
      %23 = sbr.rel (0) target = $region17
    $region16: #{tpu_custom_call.1} parent=1 // pred_region
      _
    $region17: #{tpu_custom_call.1} parent=1 // pred_fallthru
      _
    // Predicated region
    $region18: #{tpu_custom_call.1} parent=1 // pred_check
      _
    $region19: #{tpu_custom_call.1} parent=1 // pred_check_branch
      %25 = sbr.rel (0) target = $region21
    $region20: #{tpu_custom_call.1} parent=1 // pred_region
      _
    $region21: #{tpu_custom_call.1} parent=1 // pred_fallthru
      _
    // Predicated region
    $region22: #{tpu_custom_call.1} parent=1 // pred_check
      _
    $region23: #{tpu_custom_call.1} parent=1 // pred_check_branch
      %27 = sbr.rel (0) target = $region25
    $region24: #{tpu_custom_call.1} parent=1 // pred_region
      _
    $region25: #{tpu_custom_call.1} parent=1 // pred_fallthru
      _
    // Predicated region
    $region26: #{tpu_custom_call.1} parent=1 // pred_check
      _
    $region27: #{tpu_custom_call.1} parent=1 // pred_check_branch
      %29 = sbr.rel (0) target = $region29
    $region28: #{tpu_custom_call.1} parent=1 // pred_region
      _
    $region29: #{tpu_custom_call.1} parent=1 // pred_fallthru
      _
    // Predicated region
    $region30: #{tpu_custom_call.1} parent=1 // pred_check
      _
    $region31: #{tpu_custom_call.1} parent=1 // pred_check_branch
      %31 = sbr.rel (0) target = $region33
    $region32: #{tpu_custom_call.1} parent=1 // pred_region
      _
    $region33: #{tpu_custom_call.1} parent=1 // pred_fallthru
      _
    // Predicated region
    $region34: #{tpu_custom_call.1} parent=1 // pred_check
      _
    $region35: #{tpu_custom_call.1} parent=1 // pred_check_branch
      %33 = sbr.rel (0) target = $region37
    $region36: #{tpu_custom_call.1} parent=1 // pred_region
      _
    $region37: #{tpu_custom_call.1} parent=1 // pred_fallthru
      _
    // Predicated region
    $region38: #{tpu_custom_call.1} parent=1 // pred_check
      _
    $region39: #{tpu_custom_call.1} parent=1 // pred_check_branch
      %35 = sbr.rel (0) target = $region41
    $region40: #{tpu_custom_call.1} parent=1 // pred_region
      _
    $region41: #{tpu_custom_call.1} parent=1 // pred_fallthru
      _
    %v36 = vld [vmem:[%s0] sm:$0xff]
    %v37 = vld [vmem:[%s0 + $0x8] sm:$0xff]
    %v38 = vld [vmem:[%s1] sm:$0xff]
    %v39 = vld [vmem:[%s1 + $0x8] sm:$0xff]
    %v40 = vld [vmem:[%s2] sm:$0xff]
    %v41 = vld [vmem:[%s2 + $0x8] sm:$0xff]
    %v42 = vld [vmem:[%s3] sm:$0xff]
    %v43 = vld [vmem:[%s3 + $0x8] sm:$0xff]
    %v44 = vld [vmem:[%s3 + $0x10] sm:$0xff]
    %v45 = vld [vmem:[%s3 + $0x18] sm:$0xff]
    %v46 = vld [vmem:[%s3 + $0x20] sm:$0xff]
    %v47 = vld [vmem:[%s3 + $0x28] sm:$0xff]
    %v48 = vld [vmem:[%s3 + $0x30] sm:$0xff]
    %v49 = vld [vmem:[%s3 + $0x38] sm:$0xff]
    %vm50 = vcmask 261120
    %v52 = vsel %vm50, %v40, 0
    %v55 = vsel %vm50, %v41, 0
    %v58 = vsel %vm50, %v42, 0
    %v61 = vsel %vm50, %v43, 0
    %v64 = vsel %vm50, %v44, 0
    %v67 = vsel %vm50, %v45, 0
    %v70 = vsel %vm50, %v46, 0
    %v73 = vsel %vm50, %v47, 0
    %v76 = vsel %vm50, %v48, 0
    %v79 = vsel %vm50, %v49, 0
    %81 = vmatprep.subr.mxu0 0.0
    %82 = vmatpush1.xpose.msra.mxu0 0.0
    %83 = vmatprep.subr.mxu0 0.0
    %84 = vmatpush1.xpose.msra.mxu0 0.0
    %85 = vmatprep.subr.mxu0 0.0
    %86 = vmatpush1.xpose.msra.mxu0 0.0
    %87 = vmatprep.subr.mxu0 0.0
    %88 = vmatpush1.xpose.msra.mxu0 0.0
    %89 = vmatprep.subr.mxu0 0.0
    %90 = vmatpush1.xpose.msra.mxu0 0.0
    %91 = vmatprep.subr.mxu0 0.0
    %92 = vmatpush1.xpose.msra.mxu0 0.0
    %93 = vmatprep.subr.mxu0 0.0
    %94 = vmatpush1.xpose.msra.mxu0 0.0
    %95 = vmatprep.subr.mxu0 0.0
    %96 = vmatpush1.xpose.msra.mxu0 0.0
    %97 = vmatprep.subr.mxu0 0.0
    %98 = vmatpush1.xpose.msra.mxu0 %v79
    %99 = vmatprep.subr.mxu0 0.0
    %100 = vmatpush1.xpose.msra.mxu0 %v76
    %101 = vmatprep.subr.mxu0 0.0
    %102 = vmatpush1.xpose.msra.mxu0 %v73
    %103 = vmatprep.subr.mxu0 0.0
    %104 = vmatpush1.xpose.msra.mxu0 %v70
    %105 = vmatprep.subr.mxu0 0.0
    %106 = vmatpush1.xpose.msra.mxu0 %v67
    %107 = vmatprep.subr.mxu0 0.0
    %108 = vmatpush1.xpose.msra.mxu0 %v64
    %109 = vmatprep.subr.mxu0 0.0
    %110 = vmatpush1.xpose.msra.mxu0 %v61
    %111 = vmatprep.subr.mxu0 0.0
    %112 = vmatpush1.xpose.msra.mxu0 %v58
    %113 = vmatprep.subr.mxu0 0.0
    %114 = vmatpush2.xpose.msra.mxu0 0.0
    %115 = vmatprep.subr.mxu0 0.0
    %116 = vmatpush2.xpose.msra.mxu0 0.0
    %117 = vmatprep.subr.mxu0 0.0
    %118 = vmatpush2.xpose.msra.mxu0 0.0
    %119 = vmatprep.subr.mxu0 0.0
    %120 = vmatpush2.xpose.msra.mxu0 0.0
    %121 = vmatprep.subr.mxu0 0.0
    %122 = vmatpush2.xpose.msra.mxu0 0.0
    %123 = vmatprep.subr.mxu0 0.0
    %124 = vmatpush2.xpose.msra.mxu0 0.0
    %125 = vmatprep.subr.mxu0 0.0
    %126 = vmatpush2.xpose.msra.mxu0 0.0
    %127 = vmatprep.subr.mxu0 0.0
    %128 = vmatpush2.xpose.msra.mxu0 0.0
    %129 = vmatprep.subr.mxu0 0.0
    %130 = vmatpush2.xpose.msra.mxu0 0.0
    %131 = vmatprep.subr.mxu0 0.0
    %132 = vmatpush2.xpose.msra.mxu0 0.0
    %133 = vmatprep.subr.mxu0 0.0
    %134 = vmatpush2.xpose.msra.mxu0 0.0
    %135 = vmatprep.subr.mxu0 0.0
    %136 = vmatpush2.xpose.msra.mxu0 0.0
    %137 = vmatprep.subr.mxu0 0.0
    %138 = vmatpush2.xpose.msra.mxu0 0.0
    %139 = vmatprep.subr.mxu0 0.0
    %140 = vmatpush2.xpose.msra.mxu0 0.0
    %141 = vmatprep.subr.mxu0 0.0
    %142 = vmatpush2.xpose.msra.mxu0 0.0
    %143 = vmatprep.subr.mxu0 0.0
    %144 = vmatpush2.xpose.msra.mxu0 0.0
    %145 = vmatprep.mubr.f32.mxu0 0.0
    %146 = vmatmul.mubr.f32.gmra.mxu0 %v52
    %v147 = vpop.f32.mrf.mxu0
    %v148 = vadd.f32 0.0, %v147
    %v149 = vpop.f32.mrf.mxu0
    %150 = vmatprep.mubr.f32.mxu0 0.0
    %151 = vmatmul.mubr.f32.gmra.mxu0 %v55
    %v152 = vpop.f32.mrf.mxu0
    %v153 = vadd.f32 0.0, %v152
    %v154 = vpop.f32.mrf.mxu0
    %155 = vdwg.mxu0
    %vm156 = vcmask 523264
    %v157 = vsel %vm156, %v148, -inf
    %158 = vmax.xlane.f32.xlu0 %v157
    %v159 = vpop.xlane.xlu0 %158
    %v160 = vsel %vm156, %v153, -inf
    %161 = vmax.xlane.f32.xlu0 %v160
    %v162 = vpop.xlane.xlu0 %161
    %v163 = vsub.f32 %v148, %v159
    %v164 = vsub.f32 %v153, %v162
    %v165 = vmul.f32 %v163, 1.442695
    %v166 = vpow.pop %v165
    %v167 = vmul.f32 %v164, 1.442695
    %v168 = vpow.pop %v167
    %v169 = vsel %vm156, %v166, 0.0
    %170 = vadd.xlane.f32.xlu0 %v169
    %v171 = vpop.xlane.xlu0 %170
    %v172 = vsel %vm156, %v168, 0.0
    %173 = vadd.xlane.f32.xlu0 %v172
    %v174 = vpop.xlane.xlu0 %173
    %v176 = vsel %vm156, %v166, 0
    %v179 = vsel %vm156, %v168, 0
    %181 = vmatprep.subr.mxu0 0.0
    %182 = vmatpush1.msra.mxu0 0.0
    %183 = vmatprep.subr.mxu0 0.0
    %184 = vmatpush1.msra.mxu0 0.0
    %185 = vmatprep.subr.mxu0 0.0
    %186 = vmatpush1.msra.mxu0 0.0
    %187 = vmatprep.subr.mxu0 0.0
    %188 = vmatpush1.msra.mxu0 0.0
    %189 = vmatprep.subr.mxu0 0.0
    %190 = vmatpush1.msra.mxu0 0.0
    %191 = vmatprep.subr.mxu0 0.0
    %192 = vmatpush1.msra.mxu0 0.0
    %193 = vmatprep.subr.mxu0 0.0
    %194 = vmatpush1.msra.mxu0 0.0
    %195 = vmatprep.subr.mxu0 0.0
    %196 = vmatpush1.msra.mxu0 0.0
    %197 = vmatprep.subr.mxu0 0.0
    %198 = vmatpush1.msra.mxu0 %v49
    %199 = vmatprep.subr.mxu0 0.0
    %200 = vmatpush1.msra.mxu0 %v48
    %201 = vmatprep.subr.mxu0 0.0
    %202 = vmatpush1.msra.mxu0 %v47
    %203 = vmatprep.subr.mxu0 0.0
    %204 = vmatpush1.msra.mxu0 %v46
    %205 = vmatprep.subr.mxu0 0.0
    %206 = vmatpush1.msra.mxu0 %v45
    %207 = vmatprep.subr.mxu0 0.0
    %208 = vmatpush1.msra.mxu0 %v44
    %209 = vmatprep.subr.mxu0 0.0
    %210 = vmatpush1.msra.mxu0 %v43
    %211 = vmatprep.subr.mxu0 0.0
    %212 = vmatpush1.msra.mxu0 %v42
    %213 = vmatprep.subr.mxu0 0.0
    %214 = vmatpush2.msra.mxu0 0.0
    %215 = vmatprep.subr.mxu0 0.0
    %216 = vmatpush2.msra.mxu0 0.0
    %217 = vmatprep.subr.mxu0 0.0
    %218 = vmatpush2.msra.mxu0 0.0
    %219 = vmatprep.subr.mxu0 0.0
    %220 = vmatpush2.msra.mxu0 0.0
    %221 = vmatprep.subr.mxu0 0.0
    %222 = vmatpush2.msra.mxu0 0.0
    %223 = vmatprep.subr.mxu0 0.0
    %224 = vmatpush2.msra.mxu0 0.0
    %225 = vmatprep.subr.mxu0 0.0
    %226 = vmatpush2.msra.mxu0 0.0
    %227 = vmatprep.subr.mxu0 0.0
    %228 = vmatpush2.msra.mxu0 0.0
    %229 = vmatprep.subr.mxu0 0.0
    %230 = vmatpush2.msra.mxu0 0.0
    %231 = vmatprep.subr.mxu0 0.0
    %232 = vmatpush2.msra.mxu0 0.0
    %233 = vmatprep.subr.mxu0 0.0
    %234 = vmatpush2.msra.mxu0 0.0
    %235 = vmatprep.subr.mxu0 0.0
    %236 = vmatpush2.msra.mxu0 0.0
    %237 = vmatprep.subr.mxu0 0.0
    %238 = vmatpush2.msra.mxu0 0.0
    %239 = vmatprep.subr.mxu0 0.0
    %240 = vmatpush2.msra.mxu0 0.0
    %241 = vmatprep.subr.mxu0 0.0
    %242 = vmatpush2.msra.mxu0 0.0
    %243 = vmatprep.subr.mxu0 0.0
    %244 = vmatpush2.msra.mxu0 0.0
    %245 = vmatprep.mubr.f32.mxu0 0.0
    %246 = vmatmul.mubr.f32.gmra.mxu0 %v176
    %v247 = vpop.f32.mrf.mxu0
    %v248 = vadd.f32 0.0, %v247
    %v249 = vpop.f32.mrf.mxu0
    %250 = vmatprep.mubr.f32.mxu0 0.0
    %251 = vmatmul.mubr.f32.gmra.mxu0 %v179
    %v252 = vpop.f32.mrf.mxu0
    %v253 = vadd.f32 0.0, %v252
    %v254 = vpop.f32.mrf.mxu0
    %255 = vdwg.mxu0
    %v256 = vrcp.pop %v171
    %v257 = vrcp.pop %v174
    %v258 = vmul.f32 %v248, %v256
    %v259 = vmul.f32 %v253, %v257
    %v260 = vsub.f32 %v38, %v258
    %v261 = vsub.f32 %v39, %v259
    %v262 = vld [vmem:[%s4] sm:$0xff]
    %v263 = vld [vmem:[%s4 + $0x8] sm:$0xff]
    %v264 = vld [vmem:[%s4 + $0x10] sm:$0xff]
    %v265 = vld [vmem:[%s4 + $0x18] sm:$0xff]
    %v267 = vsel %vm50, %v36, 0
    %v270 = vsel %vm50, %v37, 0
    %272 = vmatprep.subr.mxu0 0.0
    %273 = vmatpush1.msra.mxu0 0.0
    %274 = vmatprep.subr.mxu0 0.0
    %275 = vmatpush1.msra.mxu0 0.0
    %276 = vmatprep.subr.mxu0 0.0
    %277 = vmatpush1.msra.mxu0 0.0
    %278 = vmatprep.subr.mxu0 0.0
    %279 = vmatpush1.msra.mxu0 0.0
    %280 = vmatprep.subr.mxu0 0.0
    %281 = vmatpush1.msra.mxu0 0.0
    %282 = vmatprep.subr.mxu0 0.0
    %283 = vmatpush1.msra.mxu0 0.0
    %284 = vmatprep.subr.mxu0 0.0
    %285 = vmatpush1.msra.mxu0 0.0
    %286 = vmatprep.subr.mxu0 0.0
    %287 = vmatpush1.msra.mxu0 0.0
    %288 = vmatprep.subr.mxu0 0.0
    %289 = vmatpush1.msra.mxu0 0.0
    %290 = vmatprep.subr.mxu0 0.0
    %291 = vmatpush1.msra.mxu0 0.0
    %292 = vmatprep.subr.mxu0 0.0
    %293 = vmatpush1.msra.mxu0 0.0
    %294 = vmatprep.subr.mxu0 0.0
    %295 = vmatpush1.msra.mxu0 0.0
    %296 = vmatprep.subr.mxu0 0.0
    %297 = vmatpush1.msra.mxu0 %v265
    %298 = vmatprep.subr.mxu0 0.0
    %299 = vmatpush1.msra.mxu0 %v264
    %300 = vmatprep.subr.mxu0 0.0
    %301 = vmatpush1.msra.mxu0 %v263
    %302 = vmatprep.subr.mxu0 0.0
    %303 = vmatpush1.msra.mxu0 %v262
    %304 = vmatprep.subr.mxu0 0.0
    %305 = vmatpush2.msra.mxu0 0.0
    %306 = vmatprep.subr.mxu0 0.0
    %307 = vmatpush2.msra.mxu0 0.0
    %308 = vmatprep.subr.mxu0 0.0
    %309 = vmatpush2.msra.mxu0 0.0
    %310 = vmatprep.subr.mxu0 0.0
    %311 = vmatpush2.msra.mxu0 0.0
    %312 = vmatprep.subr.mxu0 0.0
    %313 = vmatpush2.msra.mxu0 0.0
    %314 = vmatprep.subr.mxu0 0.0
    %315 = vmatpush2.msra.mxu0 0.0
    %316 = vmatprep.subr.mxu0 0.0
    %317 = vmatpush2.msra.mxu0 0.0
    %318 = vmatprep.subr.mxu0 0.0
    %319 = vmatpush2.msra.mxu0 0.0
    %320 = vmatprep.subr.mxu0 0.0
    %321 = vmatpush2.msra.mxu0 0.0
    %322 = vmatprep.subr.mxu0 0.0
    %323 = vmatpush2.msra.mxu0 0.0
    %324 = vmatprep.subr.mxu0 0.0
    %325 = vmatpush2.msra.mxu0 0.0
    %326 = vmatprep.subr.mxu0 0.0
    %327 = vmatpush2.msra.mxu0 0.0
    %328 = vmatprep.subr.mxu0 0.0
    %329 = vmatpush2.msra.mxu0 0.0
    %330 = vmatprep.subr.mxu0 0.0
    %331 = vmatpush2.msra.mxu0 0.0
    %332 = vmatprep.subr.mxu0 0.0
    %333 = vmatpush2.msra.mxu0 0.0
    %334 = vmatprep.subr.mxu0 0.0
    %335 = vmatpush2.msra.mxu0 0.0
    %336 = vmatprep.mubr.f32.mxu0 0.0
    %337 = vmatmul.mubr.f32.gmra.mxu0 %v267
    %v338 = vpop.f32.mrf.mxu0
    %v339 = vadd.f32 0.0, %v338
    %v340 = vpop.f32.mrf.mxu0
    %341 = vmatprep.mubr.f32.mxu0 0.0
    %342 = vmatmul.mubr.f32.gmra.mxu0 %v270
    %v343 = vpop.f32.mrf.mxu0
    %v344 = vadd.f32 0.0, %v343
    %v345 = vpop.f32.mrf.mxu0
    %346 = vdwg.mxu0
    %v347 = vld [vmem:[%s5] sm:$0xff]
    %v348 = vld [vmem:[%s5 + $0x8] sm:$0xff]
    %v349 = vld [vmem:[%s5 + $0x10] sm:$0xff]
    %v350 = vld [vmem:[%s5 + $0x18] sm:$0xff]
    %v352 = vsel %vm50, %v260, 0
    %v355 = vsel %vm50, %v261, 0
    %357 = vmatprep.subr.mxu0 0.0
    %358 = vmatpush1.msra.mxu0 0.0
    %359 = vmatprep.subr.mxu0 0.0
    %360 = vmatpush1.msra.mxu0 0.0
    %361 = vmatprep.subr.mxu0 0.0
    %362 = vmatpush1.msra.mxu0 0.0
    %363 = vmatprep.subr.mxu0 0.0
    %364 = vmatpush1.msra.mxu0 0.0
    %365 = vmatprep.subr.mxu0 0.0
    %366 = vmatpush1.msra.mxu0 0.0
    %367 = vmatprep.subr.mxu0 0.0
    %368 = vmatpush1.msra.mxu0 0.0
    %369 = vmatprep.subr.mxu0 0.0
    %370 = vmatpush1.msra.mxu0 0.0
    %371 = vmatprep.subr.mxu0 0.0
    %372 = vmatpush1.msra.mxu0 0.0
    %373 = vmatprep.subr.mxu0 0.0
    %374 = vmatpush1.msra.mxu0 0.0
    %375 = vmatprep.subr.mxu0 0.0
    %376 = vmatpush1.msra.mxu0 0.0
    %377 = vmatprep.subr.mxu0 0.0
    %378 = vmatpush1.msra.mxu0 0.0
    %379 = vmatprep.subr.mxu0 0.0
    %380 = vmatpush1.msra.mxu0 0.0
    %381 = vmatprep.subr.mxu0 0.0
    %382 = vmatpush1.msra.mxu0 %v350
    %383 = vmatprep.subr.mxu0 0.0
    %384 = vmatpush1.msra.mxu0 %v349
    %385 = vmatprep.subr.mxu0 0.0
    %386 = vmatpush1.msra.mxu0 %v348
    %387 = vmatprep.subr.mxu0 0.0
    %388 = vmatpush1.msra.mxu0 %v347
    %389 = vmatprep.subr.mxu0 0.0
    %390 = vmatpush2.msra.mxu0 0.0
    %391 = vmatprep.subr.mxu0 0.0
    %392 = vmatpush2.msra.mxu0 0.0
    %393 = vmatprep.subr.mxu0 0.0
    %394 = vmatpush2.msra.mxu0 0.0
    %395 = vmatprep.subr.mxu0 0.0
    %396 = vmatpush2.msra.mxu0 0.0
    %397 = vmatprep.subr.mxu0 0.0
    %398 = vmatpush2.msra.mxu0 0.0
    %399 = vmatprep.subr.mxu0 0.0
    %400 = vmatpush2.msra.mxu0 0.0
    %401 = vmatprep.subr.mxu0 0.0
    %402 = vmatpush2.msra.mxu0 0.0
    %403 = vmatprep.subr.mxu0 0.0
    %404 = vmatpush2.msra.mxu0 0.0
    %405 = vmatprep.subr.mxu0 0.0
    %406 = vmatpush2.msra.mxu0 0.0
    %407 = vmatprep.subr.mxu0 0.0
    %408 = vmatpush2.msra.mxu0 0.0
    %409 = vmatprep.subr.mxu0 0.0
    %410 = vmatpush2.msra.mxu0 0.0
    %411 = vmatprep.subr.mxu0 0.0
    %412 = vmatpush2.msra.mxu0 0.0
    %413 = vmatprep.subr.mxu0 0.0
    %414 = vmatpush2.msra.mxu0 0.0
    %415 = vmatprep.subr.mxu0 0.0
    %416 = vmatpush2.msra.mxu0 0.0
    %417 = vmatprep.subr.mxu0 0.0
    %418 = vmatpush2.msra.mxu0 0.0
    %419 = vmatprep.subr.mxu0 0.0
    %420 = vmatpush2.msra.mxu0 0.0
    %421 = vmatprep.mubr.f32.mxu0 0.0
    %422 = vmatmul.mubr.f32.gmra.mxu0 %v352
    %v423 = vpop.f32.mrf.mxu0
    %v424 = vadd.f32 0.0, %v423
    %v425 = vpop.f32.mrf.mxu0
    %426 = vmatprep.mubr.f32.mxu0 0.0
    %427 = vmatmul.mubr.f32.gmra.mxu0 %v355
    %v428 = vpop.f32.mrf.mxu0
    %v429 = vadd.f32 0.0, %v428
    %v430 = vpop.f32.mrf.mxu0
    %431 = vdwg.mxu0
    %v432 = vld [vmem:[%s7] sm:$0xff]
    %v433 = vld [vmem:[%s8] sm:$0xff]
    %v434 = vld [vmem:[%s9] sm:$0xff]
    %435 = vrot.lane.b32.xlu0 %v339, 112
    %v436 = vpop.permute.xlu0 %435
    %437 = vrot.lane.b32.xlu0 %v344, 112
    %v438 = vpop.permute.xlu0 %437
    %439 = vrot.lane.b32.xlu0 %v339, 16
    %v440 = vpop.permute.xlu0 %439
    %441 = vrot.lane.b32.xlu0 %v344, 16
    %v442 = vpop.permute.xlu0 %441
    %v443 = vmul.f32 %v339, %v432
    %v444 = vmul.f32 %v344, %v432
    %v445 = vmul.f32 %v436, %v433
    %v446 = vmul.f32 %v438, %v433
    %v447 = vadd.f32 %v443, %v445
    %v448 = vadd.f32 %v444, %v446
    %v449 = vmul.f32 %v440, %v434
    %v450 = vmul.f32 %v442, %v434
    %v451 = vadd.f32 %v447, %v449
    %v452 = vadd.f32 %v448, %v450
    %v453 = vlaneseq
    %v454 = vshrl.u32 %v453, 7
    %v455 = vlaneseq
    %v456 = vand.u32 %v455, 127
    %vm457 = vcmp.ge.s32.totalorder %v456, %v454
    %vm458 = vcmp.eq.s32.totalorder %v454, 0
    %vm459 = vcmp.eq.s32.totalorder %v456, 0
    %vm460 = vmand %vm458, %vm459
    %vm461 = vmxor %vm460, 1
    %vm462 = vmand %vm457, %vm461
    %464 = vrot.lane.b32.xlu0 %v451, 64
    %v465 = vpop.permute.xlu0 %464
    %v466 = vsel %vm50, %v451, 0
    %v468 = vsel %vm50, %v465, 0
    %470 = vmatprep.subr.mxu0 0.0
    %471 = vmatpush1.xpose.msra.mxu0 0.0
    %472 = vmatprep.subr.mxu0 0.0
    %473 = vmatpush1.xpose.msra.mxu0 0.0
    %474 = vmatprep.subr.mxu0 0.0
    %475 = vmatpush1.xpose.msra.mxu0 0.0
    %476 = vmatprep.subr.mxu0 0.0
    %477 = vmatpush1.xpose.msra.mxu0 0.0
    %478 = vmatprep.subr.mxu0 0.0
    %479 = vmatpush1.xpose.msra.mxu0 0.0
    %480 = vmatprep.subr.mxu0 0.0
    %481 = vmatpush1.xpose.msra.mxu0 0.0
    %482 = vmatprep.subr.mxu0 0.0
    %483 = vmatpush1.xpose.msra.mxu0 0.0
    %484 = vmatprep.subr.mxu0 0.0
    %485 = vmatpush1.xpose.msra.mxu0 0.0
    %486 = vmatprep.subr.mxu0 0.0
    %487 = vmatpush1.xpose.msra.mxu0 0.0
    %488 = vmatprep.subr.mxu0 0.0
    %489 = vmatpush1.xpose.msra.mxu0 0.0
    %490 = vmatprep.subr.mxu0 0.0
    %491 = vmatpush1.xpose.msra.mxu0 0.0
    %492 = vmatprep.subr.mxu0 0.0
    %493 = vmatpush1.xpose.msra.mxu0 0.0
    %494 = vmatprep.subr.mxu0 0.0
    %495 = vmatpush1.xpose.msra.mxu0 0.0
    %496 = vmatprep.subr.mxu0 0.0
    %497 = vmatpush1.xpose.msra.mxu0 0.0
    %498 = vmatprep.subr.mxu0 0.0
    %499 = vmatpush1.xpose.msra.mxu0 0.0
    %500 = vmatprep.subr.mxu0 0.0
    %501 = vmatpush1.xpose.msra.mxu0 %v468
    %502 = vmatprep.subr.mxu0 0.0
    %503 = vmatpush2.xpose.msra.mxu0 0.0
    %504 = vmatprep.subr.mxu0 0.0
    %505 = vmatpush2.xpose.msra.mxu0 0.0
    %506 = vmatprep.subr.mxu0 0.0
    %507 = vmatpush2.xpose.msra.mxu0 0.0
    %508 = vmatprep.subr.mxu0 0.0
    %509 = vmatpush2.xpose.msra.mxu0 0.0
    %510 = vmatprep.subr.mxu0 0.0
    %511 = vmatpush2.xpose.msra.mxu0 0.0
    %512 = vmatprep.subr.mxu0 0.0
    %513 = vmatpush2.xpose.msra.mxu0 0.0
    %514 = vmatprep.subr.mxu0 0.0
    %515 = vmatpush2.xpose.msra.mxu0 0.0
    %516 = vmatprep.subr.mxu0 0.0
    %517 = vmatpush2.xpose.msra.mxu0 0.0
    %518 = vmatprep.subr.mxu0 0.0
    %519 = vmatpush2.xpose.msra.mxu0 0.0
    %520 = vmatprep.subr.mxu0 0.0
    %521 = vmatpush2.xpose.msra.mxu0 0.0
    %522 = vmatprep.subr.mxu0 0.0
    %523 = vmatpush2.xpose.msra.mxu0 0.0
    %524 = vmatprep.subr.mxu0 0.0
    %525 = vmatpush2.xpose.msra.mxu0 0.0
    %526 = vmatprep.subr.mxu0 0.0
    %527 = vmatpush2.xpose.msra.mxu0 0.0
    %528 = vmatprep.subr.mxu0 0.0
    %529 = vmatpush2.xpose.msra.mxu0 0.0
    %530 = vmatprep.subr.mxu0 0.0
    %531 = vmatpush2.xpose.msra.mxu0 0.0
    %532 = vmatprep.subr.mxu0 0.0
    %533 = vmatpush2.xpose.msra.mxu0 0.0
    %534 = vmatprep.mubr.f32.mxu0 0.0
    %535 = vmatmul.mubr.f32.gmra.mxu0 %v466
    %v536 = vpop.f32.mrf.mxu0
    %v537 = vadd.f32 0.0, %v536
    %v538 = vpop.f32.mrf.mxu0
    %539 = vdwg.mxu0
    %541 = vrot.lane.b32.xlu0 %v452, 64
    %v542 = vpop.permute.xlu0 %541
    %v543 = vsel %vm50, %v452, 0
    %v545 = vsel %vm50, %v542, 0
    %547 = vmatprep.subr.mxu0 0.0
    %548 = vmatpush1.xpose.msra.mxu0 0.0
    %549 = vmatprep.subr.mxu0 0.0
    %550 = vmatpush1.xpose.msra.mxu0 0.0
    %551 = vmatprep.subr.mxu0 0.0
    %552 = vmatpush1.xpose.msra.mxu0 0.0
    %553 = vmatprep.subr.mxu0 0.0
    %554 = vmatpush1.xpose.msra.mxu0 0.0
    %555 = vmatprep.subr.mxu0 0.0
    %556 = vmatpush1.xpose.msra.mxu0 0.0
    %557 = vmatprep.subr.mxu0 0.0
    %558 = vmatpush1.xpose.msra.mxu0 0.0
    %559 = vmatprep.subr.mxu0 0.0
    %560 = vmatpush1.xpose.msra.mxu0 0.0
    %561 = vmatprep.subr.mxu0 0.0
    %562 = vmatpush1.xpose.msra.mxu0 0.0
    %563 = vmatprep.subr.mxu0 0.0
    %564 = vmatpush1.xpose.msra.mxu0 0.0
    %565 = vmatprep.subr.mxu0 0.0
    %566 = vmatpush1.xpose.msra.mxu0 0.0
    %567 = vmatprep.subr.mxu0 0.0
    %568 = vmatpush1.xpose.msra.mxu0 0.0
    %569 = vmatprep.subr.mxu0 0.0
    %570 = vmatpush1.xpose.msra.mxu0 0.0
    %571 = vmatprep.subr.mxu0 0.0
    %572 = vmatpush1.xpose.msra.mxu0 0.0
    %573 = vmatprep.subr.mxu0 0.0
    %574 = vmatpush1.xpose.msra.mxu0 0.0
    %575 = vmatprep.subr.mxu0 0.0
    %576 = vmatpush1.xpose.msra.mxu0 0.0
    %577 = vmatprep.subr.mxu0 0.0
    %578 = vmatpush1.xpose.msra.mxu0 %v545
    %579 = vmatprep.subr.mxu0 0.0
    %580 = vmatpush2.xpose.msra.mxu0 0.0
    %581 = vmatprep.subr.mxu0 0.0
    %582 = vmatpush2.xpose.msra.mxu0 0.0
    %583 = vmatprep.subr.mxu0 0.0
    %584 = vmatpush2.xpose.msra.mxu0 0.0
    %585 = vmatprep.subr.mxu0 0.0
    %586 = vmatpush2.xpose.msra.mxu0 0.0
    %587 = vmatprep.subr.mxu0 0.0
    %588 = vmatpush2.xpose.msra.mxu0 0.0
    %589 = vmatprep.subr.mxu0 0.0
    %590 = vmatpush2.xpose.msra.mxu0 0.0
    %591 = vmatprep.subr.mxu0 0.0
    %592 = vmatpush2.xpose.msra.mxu0 0.0
    %593 = vmatprep.subr.mxu0 0.0
    %594 = vmatpush2.xpose.msra.mxu0 0.0
    %595 = vmatprep.subr.mxu0 0.0
    %596 = vmatpush2.xpose.msra.mxu0 0.0
    %597 = vmatprep.subr.mxu0 0.0
    %598 = vmatpush2.xpose.msra.mxu0 0.0
    %599 = vmatprep.subr.mxu0 0.0
    %600 = vmatpush2.xpose.msra.mxu0 0.0
    %601 = vmatprep.subr.mxu0 0.0
    %602 = vmatpush2.xpose.msra.mxu0 0.0
    %603 = vmatprep.subr.mxu0 0.0
    %604 = vmatpush2.xpose.msra.mxu0 0.0
    %605 = vmatprep.subr.mxu0 0.0
    %606 = vmatpush2.xpose.msra.mxu0 0.0
    %607 = vmatprep.subr.mxu0 0.0
    %608 = vmatpush2.xpose.msra.mxu0 0.0
    %609 = vmatprep.subr.mxu0 0.0
    %610 = vmatpush2.xpose.msra.mxu0 0.0
    %611 = vmatprep.mubr.f32.mxu0 0.0
    %612 = vmatmul.mubr.f32.gmra.mxu0 %v543
    %v613 = vpop.f32.mrf.mxu0
    %v614 = vadd.f32 0.0, %v613
    %v615 = vpop.f32.mrf.mxu0
    %616 = vdwg.mxu0
    %v617 = vmul.f32 %v537, 0.17677669
    %v618 = vmul.f32 %v614, 0.17677669
    %v619 = vsel %vm462, 1, 0
    %vm620 = vcmp.eq.s32.totalorder %v619, 1
    %v621 = vsel %vm620, -1e+30, %v617
    %v622 = vsel %vm620, -1e+30, %v618
    %vm623 = vcmask 64512
    %v624 = vsel %vm623, %v621, -inf
    %625 = vmax.xlane.f32.xlu0 %v624
    %v626 = vpop.xlane.xlu0 %625
    %v627 = vsel %vm623, %v622, -inf
    %628 = vmax.xlane.f32.xlu0 %v627
    %v629 = vpop.xlane.xlu0 %628
    %v630 = vsub.f32 %v621, %v626
    %v631 = vsub.f32 %v622, %v629
    %v632 = vmul.f32 %v630, 1.442695
    %v633 = vpow.pop %v632
    %v634 = vmul.f32 %v631, 1.442695
    %v635 = vpow.pop %v634
    %v636 = vsel %vm623, %v633, 0.0
    %637 = vadd.xlane.f32.xlu0 %v636
    %v638 = vpop.xlane.xlu0 %637
    %v639 = vsel %vm623, %v635, 0.0
    %640 = vadd.xlane.f32.xlu0 %v639
    %v641 = vpop.xlane.xlu0 %640
    %v643 = vsel %vm623, %v633, 0
    %645 = vmatprep.subr.mxu0 0.0
    %646 = vmatpush1.msra.mxu0 0.0
    %647 = vmatprep.subr.mxu0 0.0
    %648 = vmatpush1.msra.mxu0 0.0
    %649 = vmatprep.subr.mxu0 0.0
    %650 = vmatpush1.msra.mxu0 0.0
    %651 = vmatprep.subr.mxu0 0.0
    %652 = vmatpush1.msra.mxu0 0.0
    %653 = vmatprep.subr.mxu0 0.0
    %654 = vmatpush1.msra.mxu0 0.0
    %655 = vmatprep.subr.mxu0 0.0
    %656 = vmatpush1.msra.mxu0 0.0
    %657 = vmatprep.subr.mxu0 0.0
    %658 = vmatpush1.msra.mxu0 0.0
    %659 = vmatprep.subr.mxu0 0.0
    %660 = vmatpush1.msra.mxu0 0.0
    %661 = vmatprep.subr.mxu0 0.0
    %662 = vmatpush1.msra.mxu0 0.0
    %663 = vmatprep.subr.mxu0 0.0
    %664 = vmatpush1.msra.mxu0 0.0
    %665 = vmatprep.subr.mxu0 0.0
    %666 = vmatpush1.msra.mxu0 0.0
    %667 = vmatprep.subr.mxu0 0.0
    %668 = vmatpush1.msra.mxu0 0.0
    %669 = vmatprep.subr.mxu0 0.0
    %670 = vmatpush1.msra.mxu0 0.0
    %671 = vmatprep.subr.mxu0 0.0
    %672 = vmatpush1.msra.mxu0 0.0
    %673 = vmatprep.subr.mxu0 0.0
    %674 = vmatpush1.msra.mxu0 0.0
    %675 = vmatprep.subr.mxu0 0.0
    %676 = vmatpush1.msra.mxu0 %v424
    %677 = vmatprep.subr.mxu0 0.0
    %678 = vmatpush2.msra.mxu0 0.0
    %679 = vmatprep.subr.mxu0 0.0
    %680 = vmatpush2.msra.mxu0 0.0
    %681 = vmatprep.subr.mxu0 0.0
    %682 = vmatpush2.msra.mxu0 0.0
    %683 = vmatprep.subr.mxu0 0.0
    %684 = vmatpush2.msra.mxu0 0.0
    %685 = vmatprep.subr.mxu0 0.0
    %686 = vmatpush2.msra.mxu0 0.0
    %687 = vmatprep.subr.mxu0 0.0
    %688 = vmatpush2.msra.mxu0 0.0
    %689 = vmatprep.subr.mxu0 0.0
    %690 = vmatpush2.msra.mxu0 0.0
    %691 = vmatprep.subr.mxu0 0.0
    %692 = vmatpush2.msra.mxu0 0.0
    %693 = vmatprep.subr.mxu0 0.0
    %694 = vmatpush2.msra.mxu0 0.0
    %695 = vmatprep.subr.mxu0 0.0
    %696 = vmatpush2.msra.mxu0 0.0
    %697 = vmatprep.subr.mxu0 0.0
    %698 = vmatpush2.msra.mxu0 0.0
    %699 = vmatprep.subr.mxu0 0.0
    %700 = vmatpush2.msra.mxu0 0.0
    %701 = vmatprep.subr.mxu0 0.0
    %702 = vmatpush2.msra.mxu0 0.0
    %703 = vmatprep.subr.mxu0 0.0
    %704 = vmatpush2.msra.mxu0 0.0
    %705 = vmatprep.subr.mxu0 0.0
    %706 = vmatpush2.msra.mxu0 0.0
    %707 = vmatprep.subr.mxu0 0.0
    %708 = vmatpush2.msra.mxu0 0.0
    %709 = vmatprep.mubr.f32.mxu0 0.0
    %710 = vmatmul.mubr.f32.gmra.mxu0 %v643
    %v711 = vpop.f32.mrf.mxu0
    %v712 = vadd.f32 0.0, %v711
    %v713 = vpop.f32.mrf.mxu0
    %714 = vdwg.mxu0
    %v716 = vsel %vm623, %v635, 0
    %718 = vmatprep.subr.mxu0 0.0
    %719 = vmatpush1.msra.mxu0 0.0
    %720 = vmatprep.subr.mxu0 0.0
    %721 = vmatpush1.msra.mxu0 0.0
    %722 = vmatprep.subr.mxu0 0.0
    %723 = vmatpush1.msra.mxu0 0.0
    %724 = vmatprep.subr.mxu0 0.0
    %725 = vmatpush1.msra.mxu0 0.0
    %726 = vmatprep.subr.mxu0 0.0
    %727 = vmatpush1.msra.mxu0 0.0
    %728 = vmatprep.subr.mxu0 0.0
    %729 = vmatpush1.msra.mxu0 0.0
    %730 = vmatprep.subr.mxu0 0.0
    %731 = vmatpush1.msra.mxu0 0.0
    %732 = vmatprep.subr.mxu0 0.0
    %733 = vmatpush1.msra.mxu0 0.0
    %734 = vmatprep.subr.mxu0 0.0
    %735 = vmatpush1.msra.mxu0 0.0
    %736 = vmatprep.subr.mxu0 0.0
    %737 = vmatpush1.msra.mxu0 0.0
    %738 = vmatprep.subr.mxu0 0.0
    %739 = vmatpush1.msra.mxu0 0.0
    %740 = vmatprep.subr.mxu0 0.0
    %741 = vmatpush1.msra.mxu0 0.0
    %742 = vmatprep.subr.mxu0 0.0
    %743 = vmatpush1.msra.mxu0 0.0
    %744 = vmatprep.subr.mxu0 0.0
    %745 = vmatpush1.msra.mxu0 0.0
    %746 = vmatprep.subr.mxu0 0.0
    %747 = vmatpush1.msra.mxu0 0.0
    %748 = vmatprep.subr.mxu0 0.0
    %749 = vmatpush1.msra.mxu0 %v429
    %750 = vmatprep.subr.mxu0 0.0
    %751 = vmatpush2.msra.mxu0 0.0
    %752 = vmatprep.subr.mxu0 0.0
    %753 = vmatpush2.msra.mxu0 0.0
    %754 = vmatprep.subr.mxu0 0.0
    %755 = vmatpush2.msra.mxu0 0.0
    %756 = vmatprep.subr.mxu0 0.0
    %757 = vmatpush2.msra.mxu0 0.0
    %758 = vmatprep.subr.mxu0 0.0
    %759 = vmatpush2.msra.mxu0 0.0
    %760 = vmatprep.subr.mxu0 0.0
    %761 = vmatpush2.msra.mxu0 0.0
    %762 = vmatprep.subr.mxu0 0.0
    %763 = vmatpush2.msra.mxu0 0.0
    %764 = vmatprep.subr.mxu0 0.0
    %765 = vmatpush2.msra.mxu0 0.0
    %766 = vmatprep.subr.mxu0 0.0
    %767 = vmatpush2.msra.mxu0 0.0
    %768 = vmatprep.subr.mxu0 0.0
    %769 = vmatpush2.msra.mxu0 0.0
    %770 = vmatprep.subr.mxu0 0.0
    %771 = vmatpush2.msra.mxu0 0.0
    %772 = vmatprep.subr.mxu0 0.0
    %773 = vmatpush2.msra.mxu0 0.0
    %774 = vmatprep.subr.mxu0 0.0
    %775 = vmatpush2.msra.mxu0 0.0
    %776 = vmatprep.subr.mxu0 0.0
    %777 = vmatpush2.msra.mxu0 0.0
    %778 = vmatprep.subr.mxu0 0.0
    %779 = vmatpush2.msra.mxu0 0.0
    %780 = vmatprep.subr.mxu0 0.0
    %781 = vmatpush2.msra.mxu0 0.0
    %782 = vmatprep.mubr.f32.mxu0 0.0
    %783 = vmatmul.mubr.f32.gmra.mxu0 %v716
    %v784 = vpop.f32.mrf.mxu0
    %v785 = vadd.f32 0.0, %v784
    %v786 = vpop.f32.mrf.mxu0
    %787 = vdwg.mxu0
    %v788 = vrcp.pop %v638
    %v789 = vrcp.pop %v641
    %v790 = vmul.f32 %v712, %v788
    %v791 = vmul.f32 %v785, %v789
    %792 = vrot.lane.b32.xlu0 %v451, 96
    %v793 = vpop.permute.xlu0 %792
    %794 = vrot.lane.b32.xlu0 %v451, 32
    %v795 = vpop.permute.xlu0 %794
    %v796 = vsel %vm50, %v793, 0
    %v798 = vsel %vm50, %v795, 0
    %800 = vmatprep.subr.mxu0 0.0
    %801 = vmatpush1.xpose.msra.mxu0 0.0
    %802 = vmatprep.subr.mxu0 0.0
    %803 = vmatpush1.xpose.msra.mxu0 0.0
    %804 = vmatprep.subr.mxu0 0.0
    %805 = vmatpush1.xpose.msra.mxu0 0.0
    %806 = vmatprep.subr.mxu0 0.0
    %807 = vmatpush1.xpose.msra.mxu0 0.0
    %808 = vmatprep.subr.mxu0 0.0
    %809 = vmatpush1.xpose.msra.mxu0 0.0
    %810 = vmatprep.subr.mxu0 0.0
    %811 = vmatpush1.xpose.msra.mxu0 0.0
    %812 = vmatprep.subr.mxu0 0.0
    %813 = vmatpush1.xpose.msra.mxu0 0.0
    %814 = vmatprep.subr.mxu0 0.0
    %815 = vmatpush1.xpose.msra.mxu0 0.0
    %816 = vmatprep.subr.mxu0 0.0
    %817 = vmatpush1.xpose.msra.mxu0 0.0
    %818 = vmatprep.subr.mxu0 0.0
    %819 = vmatpush1.xpose.msra.mxu0 0.0
    %820 = vmatprep.subr.mxu0 0.0
    %821 = vmatpush1.xpose.msra.mxu0 0.0
    %822 = vmatprep.subr.mxu0 0.0
    %823 = vmatpush1.xpose.msra.mxu0 0.0
    %824 = vmatprep.subr.mxu0 0.0
    %825 = vmatpush1.xpose.msra.mxu0 0.0
    %826 = vmatprep.subr.mxu0 0.0
    %827 = vmatpush1.xpose.msra.mxu0 0.0
    %828 = vmatprep.subr.mxu0 0.0
    %829 = vmatpush1.xpose.msra.mxu0 0.0
    %830 = vmatprep.subr.mxu0 0.0
    %831 = vmatpush1.xpose.msra.mxu0 %v798
    %832 = vmatprep.subr.mxu0 0.0
    %833 = vmatpush2.xpose.msra.mxu0 0.0
    %834 = vmatprep.subr.mxu0 0.0
    %835 = vmatpush2.xpose.msra.mxu0 0.0
    %836 = vmatprep.subr.mxu0 0.0
    %837 = vmatpush2.xpose.msra.mxu0 0.0
    %838 = vmatprep.subr.mxu0 0.0
    %839 = vmatpush2.xpose.msra.mxu0 0.0
    %840 = vmatprep.subr.mxu0 0.0
    %841 = vmatpush2.xpose.msra.mxu0 0.0
    %842 = vmatprep.subr.mxu0 0.0
    %843 = vmatpush2.xpose.msra.mxu0 0.0
    %844 = vmatprep.subr.mxu0 0.0
    %845 = vmatpush2.xpose.msra.mxu0 0.0
    %846 = vmatprep.subr.mxu0 0.0
    %847 = vmatpush2.xpose.msra.mxu0 0.0
    %848 = vmatprep.subr.mxu0 0.0
    %849 = vmatpush2.xpose.msra.mxu0 0.0
    %850 = vmatprep.subr.mxu0 0.0
    %851 = vmatpush2.xpose.msra.mxu0 0.0
    %852 = vmatprep.subr.mxu0 0.0
    %853 = vmatpush2.xpose.msra.mxu0 0.0
    %854 = vmatprep.subr.mxu0 0.0
    %855 = vmatpush2.xpose.msra.mxu0 0.0
    %856 = vmatprep.subr.mxu0 0.0
    %857 = vmatpush2.xpose.msra.mxu0 0.0
    %858 = vmatprep.subr.mxu0 0.0
    %859 = vmatpush2.xpose.msra.mxu0 0.0
    %860 = vmatprep.subr.mxu0 0.0
    %861 = vmatpush2.xpose.msra.mxu0 0.0
    %862 = vmatprep.subr.mxu0 0.0
    %863 = vmatpush2.xpose.msra.mxu0 0.0
    %864 = vmatprep.mubr.f32.mxu0 0.0
    %865 = vmatmul.mubr.f32.gmra.mxu0 %v796
    %v866 = vpop.f32.mrf.mxu0
    %v867 = vadd.f32 0.0, %v866
    %v868 = vpop.f32.mrf.mxu0
    %869 = vdwg.mxu0
    %870 = vrot.lane.b32.xlu0 %v452, 96
    %v871 = vpop.permute.xlu0 %870
    %872 = vrot.lane.b32.xlu0 %v452, 32
    %v873 = vpop.permute.xlu0 %872
    %v874 = vsel %vm50, %v871, 0
    %v876 = vsel %vm50, %v873, 0
    %878 = vmatprep.subr.mxu0 0.0
    %879 = vmatpush1.xpose.msra.mxu0 0.0
    %880 = vmatprep.subr.mxu0 0.0
    %881 = vmatpush1.xpose.msra.mxu0 0.0
    %882 = vmatprep.subr.mxu0 0.0
    %883 = vmatpush1.xpose.msra.mxu0 0.0
    %884 = vmatprep.subr.mxu0 0.0
    %885 = vmatpush1.xpose.msra.mxu0 0.0
    %886 = vmatprep.subr.mxu0 0.0
    %887 = vmatpush1.xpose.msra.mxu0 0.0
    %888 = vmatprep.subr.mxu0 0.0
    %889 = vmatpush1.xpose.msra.mxu0 0.0
    %890 = vmatprep.subr.mxu0 0.0
    %891 = vmatpush1.xpose.msra.mxu0 0.0
    %892 = vmatprep.subr.mxu0 0.0
    %893 = vmatpush1.xpose.msra.mxu0 0.0
    %894 = vmatprep.subr.mxu0 0.0
    %895 = vmatpush1.xpose.msra.mxu0 0.0
    %896 = vmatprep.subr.mxu0 0.0
    %897 = vmatpush1.xpose.msra.mxu0 0.0
    %898 = vmatprep.subr.mxu0 0.0
    %899 = vmatpush1.xpose.msra.mxu0 0.0
    %900 = vmatprep.subr.mxu0 0.0
    %901 = vmatpush1.xpose.msra.mxu0 0.0
    %902 = vmatprep.subr.mxu0 0.0
    %903 = vmatpush1.xpose.msra.mxu0 0.0
    %904 = vmatprep.subr.mxu0 0.0
    %905 = vmatpush1.xpose.msra.mxu0 0.0
    %906 = vmatprep.subr.mxu0 0.0
    %907 = vmatpush1.xpose.msra.mxu0 0.0
    %908 = vmatprep.subr.mxu0 0.0
    %909 = vmatpush1.xpose.msra.mxu0 %v876
    %910 = vmatprep.subr.mxu0 0.0
    %911 = vmatpush2.xpose.msra.mxu0 0.0
    %912 = vmatprep.subr.mxu0 0.0
    %913 = vmatpush2.xpose.msra.mxu0 0.0
    %914 = vmatprep.subr.mxu0 0.0
    %915 = vmatpush2.xpose.msra.mxu0 0.0
    %916 = vmatprep.subr.mxu0 0.0
    %917 = vmatpush2.xpose.msra.mxu0 0.0
    %918 = vmatprep.subr.mxu0 0.0
    %919 = vmatpush2.xpose.msra.mxu0 0.0
    %920 = vmatprep.subr.mxu0 0.0
    %921 = vmatpush2.xpose.msra.mxu0 0.0
    %922 = vmatprep.subr.mxu0 0.0
    %923 = vmatpush2.xpose.msra.mxu0 0.0
    %924 = vmatprep.subr.mxu0 0.0
    %925 = vmatpush2.xpose.msra.mxu0 0.0
    %926 = vmatprep.subr.mxu0 0.0
    %927 = vmatpush2.xpose.msra.mxu0 0.0
    %928 = vmatprep.subr.mxu0 0.0
    %929 = vmatpush2.xpose.msra.mxu0 0.0
    %930 = vmatprep.subr.mxu0 0.0
    %931 = vmatpush2.xpose.msra.mxu0 0.0
    %932 = vmatprep.subr.mxu0 0.0
    %933 = vmatpush2.xpose.msra.mxu0 0.0
    %934 = vmatprep.subr.mxu0 0.0
    %935 = vmatpush2.xpose.msra.mxu0 0.0
    %936 = vmatprep.subr.mxu0 0.0
    %937 = vmatpush2.xpose.msra.mxu0 0.0
    %938 = vmatprep.subr.mxu0 0.0
    %939 = vmatpush2.xpose.msra.mxu0 0.0
    %940 = vmatprep.subr.mxu0 0.0
    %941 = vmatpush2.xpose.msra.mxu0 0.0
    %942 = vmatprep.mubr.f32.mxu0 0.0
    %943 = vmatmul.mubr.f32.gmra.mxu0 %v874
    %v944 = vpop.f32.mrf.mxu0
    %v945 = vadd.f32 0.0, %v944
    %v946 = vpop.f32.mrf.mxu0
    %947 = vdwg.mxu0
    %v948 = vmul.f32 %v867, 0.17677669
    %v949 = vmul.f32 %v945, 0.17677669
    %v950 = vsel %vm620, -1e+30, %v948
    %v951 = vsel %vm620, -1e+30, %v949
    %v952 = vsel %vm623, %v950, -inf
    %953 = vmax.xlane.f32.xlu0 %v952
    %v954 = vpop.xlane.xlu0 %953
    %v955 = vsel %vm623, %v951, -inf
    %956 = vmax.xlane.f32.xlu0 %v955
    %v957 = vpop.xlane.xlu0 %956
    %v958 = vsub.f32 %v950, %v954
    %v959 = vsub.f32 %v951, %v957
    %v960 = vmul.f32 %v958, 1.442695
    %v961 = vpow.pop %v960
    %v962 = vmul.f32 %v959, 1.442695
    %v963 = vpow.pop %v962
    %v964 = vsel %vm623, %v961, 0.0
    %965 = vadd.xlane.f32.xlu0 %v964
    %v966 = vpop.xlane.xlu0 %965
    %v967 = vsel %vm623, %v963, 0.0
    %968 = vadd.xlane.f32.xlu0 %v967
    %v969 = vpop.xlane.xlu0 %968
    %971 = vrot.lane.b32.xlu0 %v424, 96
    %v972 = vpop.permute.xlu0 %971
    %v975 = vsel %vm623, %v961, 0
    %977 = vmatprep.subr.mxu0 0.0
    %978 = vmatpush1.msra.mxu0 0.0
    %979 = vmatprep.subr.mxu0 0.0
    %980 = vmatpush1.msra.mxu0 0.0
    %981 = vmatprep.subr.mxu0 0.0
    %982 = vmatpush1.msra.mxu0 0.0
    %983 = vmatprep.subr.mxu0 0.0
    %984 = vmatpush1.msra.mxu0 0.0
    %985 = vmatprep.subr.mxu0 0.0
    %986 = vmatpush1.msra.mxu0 0.0
    %987 = vmatprep.subr.mxu0 0.0
    %988 = vmatpush1.msra.mxu0 0.0
    %989 = vmatprep.subr.mxu0 0.0
    %990 = vmatpush1.msra.mxu0 0.0
    %991 = vmatprep.subr.mxu0 0.0
    %992 = vmatpush1.msra.mxu0 0.0
    %993 = vmatprep.subr.mxu0 0.0
    %994 = vmatpush1.msra.mxu0 0.0
    %995 = vmatprep.subr.mxu0 0.0
    %996 = vmatpush1.msra.mxu0 0.0
    %997 = vmatprep.subr.mxu0 0.0
    %998 = vmatpush1.msra.mxu0 0.0
    %999 = vmatprep.subr.mxu0 0.0
    %1000 = vmatpush1.msra.mxu0 0.0
    %1001 = vmatprep.subr.mxu0 0.0
    %1002 = vmatpush1.msra.mxu0 0.0
    %1003 = vmatprep.subr.mxu0 0.0
    %1004 = vmatpush1.msra.mxu0 0.0
    %1005 = vmatprep.subr.mxu0 0.0
    %1006 = vmatpush1.msra.mxu0 0.0
    %1007 = vmatprep.subr.mxu0 0.0
    %1008 = vmatpush1.msra.mxu0 %v972
    %1009 = vmatprep.subr.mxu0 0.0
    %1010 = vmatpush2.msra.mxu0 0.0
    %1011 = vmatprep.subr.mxu0 0.0
    %1012 = vmatpush2.msra.mxu0 0.0
    %1013 = vmatprep.subr.mxu0 0.0
    %1014 = vmatpush2.msra.mxu0 0.0
    %1015 = vmatprep.subr.mxu0 0.0
    %1016 = vmatpush2.msra.mxu0 0.0
    %1017 = vmatprep.subr.mxu0 0.0
    %1018 = vmatpush2.msra.mxu0 0.0
    %1019 = vmatprep.subr.mxu0 0.0
    %1020 = vmatpush2.msra.mxu0 0.0
    %1021 = vmatprep.subr.mxu0 0.0
    %1022 = vmatpush2.msra.mxu0 0.0
    %1023 = vmatprep.subr.mxu0 0.0
    %1024 = vmatpush2.msra.mxu0 0.0
    %1025 = vmatprep.subr.mxu0 0.0
    %1026 = vmatpush2.msra.mxu0 0.0
    %1027 = vmatprep.subr.mxu0 0.0
    %1028 = vmatpush2.msra.mxu0 0.0
    %1029 = vmatprep.subr.mxu0 0.0
    %1030 = vmatpush2.msra.mxu0 0.0
    %1031 = vmatprep.subr.mxu0 0.0
    %1032 = vmatpush2.msra.mxu0 0.0
    %1033 = vmatprep.subr.mxu0 0.0
    %1034 = vmatpush2.msra.mxu0 0.0
    %1035 = vmatprep.subr.mxu0 0.0
    %1036 = vmatpush2.msra.mxu0 0.0
    %1037 = vmatprep.subr.mxu0 0.0
    %1038 = vmatpush2.msra.mxu0 0.0
    %1039 = vmatprep.subr.mxu0 0.0
    %1040 = vmatpush2.msra.mxu0 0.0
    %1041 = vmatprep.mubr.f32.mxu0 0.0
    %1042 = vmatmul.mubr.f32.gmra.mxu0 %v975
    %v1043 = vpop.f32.mrf.mxu0
    %v1044 = vadd.f32 0.0, %v1043
    %v1045 = vpop.f32.mrf.mxu0
    %1046 = vdwg.mxu0
    %1048 = vrot.lane.b32.xlu0 %v429, 96
    %v1049 = vpop.permute.xlu0 %1048
    %v1052 = vsel %vm623, %v963, 0
    %1054 = vmatprep.subr.mxu0 0.0
    %1055 = vmatpush1.msra.mxu0 0.0
    %1056 = vmatprep.subr.mxu0 0.0
    %1057 = vmatpush1.msra.mxu0 0.0
    %1058 = vmatprep.subr.mxu0 0.0
    %1059 = vmatpush1.msra.mxu0 0.0
    %1060 = vmatprep.subr.mxu0 0.0
    %1061 = vmatpush1.msra.mxu0 0.0
    %1062 = vmatprep.subr.mxu0 0.0
    %1063 = vmatpush1.msra.mxu0 0.0
    %1064 = vmatprep.subr.mxu0 0.0
    %1065 = vmatpush1.msra.mxu0 0.0
    %1066 = vmatprep.subr.mxu0 0.0
    %1067 = vmatpush1.msra.mxu0 0.0
    %1068 = vmatprep.subr.mxu0 0.0
    %1069 = vmatpush1.msra.mxu0 0.0
    %1070 = vmatprep.subr.mxu0 0.0
    %1071 = vmatpush1.msra.mxu0 0.0
    %1072 = vmatprep.subr.mxu0 0.0
    %1073 = vmatpush1.msra.mxu0 0.0
    %1074 = vmatprep.subr.mxu0 0.0
    %1075 = vmatpush1.msra.mxu0 0.0
    %1076 = vmatprep.subr.mxu0 0.0
    %1077 = vmatpush1.msra.mxu0 0.0
    %1078 = vmatprep.subr.mxu0 0.0
    %1079 = vmatpush1.msra.mxu0 0.0
    %1080 = vmatprep.subr.mxu0 0.0
    %1081 = vmatpush1.msra.mxu0 0.0
    %1082 = vmatprep.subr.mxu0 0.0
    %1083 = vmatpush1.msra.mxu0 0.0
    %1084 = vmatprep.subr.mxu0 0.0
    %1085 = vmatpush1.msra.mxu0 %v1049
    %1086 = vmatprep.subr.mxu0 0.0
    %1087 = vmatpush2.msra.mxu0 0.0
    %1088 = vmatprep.subr.mxu0 0.0
    %1089 = vmatpush2.msra.mxu0 0.0
    %1090 = vmatprep.subr.mxu0 0.0
    %1091 = vmatpush2.msra.mxu0 0.0
    %1092 = vmatprep.subr.mxu0 0.0
    %1093 = vmatpush2.msra.mxu0 0.0
    %1094 = vmatprep.subr.mxu0 0.0
    %1095 = vmatpush2.msra.mxu0 0.0
    %1096 = vmatprep.subr.mxu0 0.0
    %1097 = vmatpush2.msra.mxu0 0.0
    %1098 = vmatprep.subr.mxu0 0.0
    %1099 = vmatpush2.msra.mxu0 0.0
    %1100 = vmatprep.subr.mxu0 0.0
    %1101 = vmatpush2.msra.mxu0 0.0
    %1102 = vmatprep.subr.mxu0 0.0
    %1103 = vmatpush2.msra.mxu0 0.0
    %1104 = vmatprep.subr.mxu0 0.0
    %1105 = vmatpush2.msra.mxu0 0.0
    %1106 = vmatprep.subr.mxu0 0.0
    %1107 = vmatpush2.msra.mxu0 0.0
    %1108 = vmatprep.subr.mxu0 0.0
    %1109 = vmatpush2.msra.mxu0 0.0
    %1110 = vmatprep.subr.mxu0 0.0
    %1111 = vmatpush2.msra.mxu0 0.0
    %1112 = vmatprep.subr.mxu0 0.0
    %1113 = vmatpush2.msra.mxu0 0.0
    %1114 = vmatprep.subr.mxu0 0.0
    %1115 = vmatpush2.msra.mxu0 0.0
    %1116 = vmatprep.subr.mxu0 0.0
    %1117 = vmatpush2.msra.mxu0 0.0
    %1118 = vmatprep.mubr.f32.mxu0 0.0
    %1119 = vmatmul.mubr.f32.gmra.mxu0 %v1052
    %v1120 = vpop.f32.mrf.mxu0
    %v1121 = vadd.f32 0.0, %v1120
    %v1122 = vpop.f32.mrf.mxu0
    %1123 = vdwg.mxu0
    %v1124 = vrcp.pop %v966
    %v1125 = vrcp.pop %v969
    %v1126 = vmul.f32 %v1044, %v1124
    %v1127 = vmul.f32 %v1121, %v1125
    %1130 = vrot.lane.b32.xlu0 %v1126, 32
    %v1131 = vpop.permute.xlu0 %1130
    %1132 = vrot.lane.b32.xlu0 %v1127, 32
    %v1133 = vpop.permute.xlu0 %1132
    %v1136 = vsel %vm50, %v790, %v1131
    %v1137 = vsel %vm50, %v791, %v1133
    %v1138 = vld [vmem:[%s6] sm:$0xff]
    %v1139 = vld [vmem:[%s6 + $0x8] sm:$0xff]
    %v1140 = vld [vmem:[%s6 + $0x10] sm:$0xff]
    %v1141 = vld [vmem:[%s6 + $0x18] sm:$0xff]
    %v1142 = vld [vmem:[%s6 + $0x20] sm:$0xff]
    %v1143 = vld [vmem:[%s6 + $0x28] sm:$0xff]
    %v1144 = vld [vmem:[%s6 + $0x30] sm:$0xff]
    %v1145 = vld [vmem:[%s6 + $0x38] sm:$0xff]
    %v1147 = vsel %vm156, %v1136, 0
    %v1150 = vsel %vm156, %v1137, 0
    %1152 = vmatprep.subr.mxu0 0.0
    %1153 = vmatpush1.msra.mxu0 0.0
    %1154 = vmatprep.subr.mxu0 0.0
    %1155 = vmatpush1.msra.mxu0 0.0
    %1156 = vmatprep.subr.mxu0 0.0
    %1157 = vmatpush1.msra.mxu0 0.0
    %1158 = vmatprep.subr.mxu0 0.0
    %1159 = vmatpush1.msra.mxu0 0.0
    %1160 = vmatprep.subr.mxu0 0.0
    %1161 = vmatpush1.msra.mxu0 0.0
    %1162 = vmatprep.subr.mxu0 0.0
    %1163 = vmatpush1.msra.mxu0 0.0
    %1164 = vmatprep.subr.mxu0 0.0
    %1165 = vmatpush1.msra.mxu0 0.0
    %1166 = vmatprep.subr.mxu0 0.0
    %1167 = vmatpush1.msra.mxu0 0.0
    %1168 = vmatprep.subr.mxu0 0.0
    %1169 = vmatpush1.msra.mxu0 %v1145
    %1170 = vmatprep.subr.mxu0 0.0
    %1171 = vmatpush1.msra.mxu0 %v1144
    %1172 = vmatprep.subr.mxu0 0.0
    %1173 = vmatpush1.msra.mxu0 %v1143
    %1174 = vmatprep.subr.mxu0 0.0
    %1175 = vmatpush1.msra.mxu0 %v1142
    %1176 = vmatprep.subr.mxu0 0.0
    %1177 = vmatpush1.msra.mxu0 %v1141
    %1178 = vmatprep.subr.mxu0 0.0
    %1179 = vmatpush1.msra.mxu0 %v1140
    %1180 = vmatprep.subr.mxu0 0.0
    %1181 = vmatpush1.msra.mxu0 %v1139
    %1182 = vmatprep.subr.mxu0 0.0
    %1183 = vmatpush1.msra.mxu0 %v1138
    %1184 = vmatprep.subr.mxu0 0.0
    %1185 = vmatpush2.msra.mxu0 0.0
    %1186 = vmatprep.subr.mxu0 0.0
    %1187 = vmatpush2.msra.mxu0 0.0
    %1188 = vmatprep.subr.mxu0 0.0
    %1189 = vmatpush2.msra.mxu0 0.0
    %1190 = vmatprep.subr.mxu0 0.0
    %1191 = vmatpush2.msra.mxu0 0.0
    %1192 = vmatprep.subr.mxu0 0.0
    %1193 = vmatpush2.msra.mxu0 0.0
    %1194 = vmatprep.subr.mxu0 0.0
    %1195 = vmatpush2.msra.mxu0 0.0
    %1196 = vmatprep.subr.mxu0 0.0
    %1197 = vmatpush2.msra.mxu0 0.0
    %1198 = vmatprep.subr.mxu0 0.0
    %1199 = vmatpush2.msra.mxu0 0.0
    %1200 = vmatprep.subr.mxu0 0.0
    %1201 = vmatpush2.msra.mxu0 0.0
    %1202 = vmatprep.subr.mxu0 0.0
    %1203 = vmatpush2.msra.mxu0 0.0
    %1204 = vmatprep.subr.mxu0 0.0
    %1205 = vmatpush2.msra.mxu0 0.0
    %1206 = vmatprep.subr.mxu0 0.0
    %1207 = vmatpush2.msra.mxu0 0.0
    %1208 = vmatprep.subr.mxu0 0.0
    %1209 = vmatpush2.msra.mxu0 0.0
    %1210 = vmatprep.subr.mxu0 0.0
    %1211 = vmatpush2.msra.mxu0 0.0
    %1212 = vmatprep.subr.mxu0 0.0
    %1213 = vmatpush2.msra.mxu0 0.0
    %1214 = vmatprep.subr.mxu0 0.0
    %1215 = vmatpush2.msra.mxu0 0.0
    %1216 = vmatprep.mubr.f32.mxu0 0.0
    %1217 = vmatmul.mubr.f32.gmra.mxu0 %v1147
    %v1218 = vpop.f32.mrf.mxu0
    %v1219 = vadd.f32 0.0, %v1218
    %v1220 = vpop.f32.mrf.mxu0
    %1221 = vmatprep.mubr.f32.mxu0 0.0
    %1222 = vmatmul.mubr.f32.gmra.mxu0 %v1150
    %v1223 = vpop.f32.mrf.mxu0
    %v1224 = vadd.f32 0.0, %v1223
    %v1225 = vpop.f32.mrf.mxu0
    %1226 = vdwg.mxu0
    %v1227 = vadd.f32 %v40, %v1219
    %v1228 = vadd.f32 %v41, %v1224
    %1229 = vst.msk [vmem:[#allocation2] sm:$0xff] %vm50, %v1227
    %1230 = vst.msk [vmem:[#allocation2 + $0x8] sm:$0xff] %vm50, %v1228
    // Predicated region
    $region42: #{tpu_custom_call.1} parent=1 // pred_check
      _
    $region43: #{tpu_custom_call.1} parent=1 // pred_check_branch
      %1232 = sbr.rel (0) target = $region45
    $region44: #{tpu_custom_call.1} parent=1 // pred_region
      %s1234 = ssub.s32 256, 256
      %1235 = vsyncadd [#allocation3], %s1234
      %s1236 = sshll.u32 [#allocation2], 4
      %s1237 = int_to_ptr.vmem [resolvable:$true] %s1236
      %1242 = dma.vmem_to_hbm [thread:$0]  %s1237, 256, %s10, [#allocation3], 128, 128, 8
    $region45: #{tpu_custom_call.1} parent=1 // pred_fallthru
      _
    // Predicated region
    $region46: #{tpu_custom_call.1} parent=1 // pred_check
      _
    $region47: #{tpu_custom_call.1} parent=1 // pred_check_branch
      %1244 = sbr.rel (0) target = $region49
    $region48: #{tpu_custom_call.1} parent=1 // pred_region
      %1245 = dma.done [#allocation3], 256
    $region49: #{tpu_custom_call.1} parent=1 // pred_fallthru
      _
    %1246 = vsyncpa [#allocation3], 1

</llo_original>
